<compile_context>
chip_gen: v6e
topology: v6e:2x2x1
jax: 0.10.0
libtpu: 0.0.40
codegen_flags: <defaults>
</compile_context>

<pallas_src>
import jax
import jax.numpy as jnp
from jax.experimental import pallas as pl
from jax.experimental.pallas import tpu as pltpu


def _round_up(x, m):
    return ((x + m - 1) // m) * m


def categnn_kernel(adj_ref, t_ref, w1_ref, b1_ref, w2_ref, b2_ref, w3_ref, b3_ref,
                   out_ref, acc_ref):
    k = pl.program_id(1)

    @pl.when(k == 0)
    def _init():
        acc_ref[...] = jnp.zeros_like(acc_ref)

    # adj is streamed in a narrow dtype (int8 for 0/1 adjacency) to cut HBM
    # traffic; cast to f32 on the VPU before feeding the MXU.
    adj = adj_ref[...].astype(jnp.float32)

    # Partial neighborhood aggregation for this (row, k) tile: (tn, D_out)
    acc_ref[...] += jnp.dot(adj, t_ref[...], preferred_element_type=jnp.float32)

    @pl.when(k == pl.num_programs(1) - 1)
    def _finalize():
        agg = acc_ref[...]
        # MLPReadout (L=2): Linear -> ReLU -> Linear -> ReLU -> Linear
        y = jnp.maximum(jnp.dot(agg, w1_ref[...],
                                preferred_element_type=jnp.float32) + b1_ref[...], 0.0)
        y = jnp.maximum(jnp.dot(y, w2_ref[...],
                                preferred_element_type=jnp.float32) + b2_ref[...], 0.0)
        y = jnp.dot(y, w3_ref[...],
                    preferred_element_type=jnp.float32) + b3_ref[...]
        # Dropout is identity in eval mode.
        # TODO(synk): training-mode dropout not reproduced (torch RNG stream
        # cannot be matched); would use pltpu.prng_seed / pltpu.stateful_bernoulli.
        out_ref[...] = y.astype(out_ref.dtype)


def _vmem_bytes(tn, tk, d_out, d_out_pad, h1, h2, adj_itemsize):
    adj_b = 2 * tn * tk * adj_itemsize          # double-buffered adj tile
    t_b = 2 * tk * d_out * 4                    # double-buffered t tile
    out_b = 2 * tn * d_out_pad * 4              # double-buffered output tile
    acc_b = tn * d_out * 4                      # accumulator scratch
    params = 2 * 4 * (d_out * h1 + h1 + h1 * h2 + h2 + h2 * d_out_pad + d_out_pad)
    return adj_b + t_b + out_b + acc_b + params


def categnn_layer(adj, weight, w1, b1, w2, b2, w3, b3, h=None, *,
                  tn=256, tk=1024, adj_is_binary=True):
    N = adj.shape[0]
    d_in, d_out = weight.shape
    h1 = w1.shape[1]
    h2 = w2.shape[1]

    # h is None in the module's forward -> all-ones node features.
    if h is None:
        h = jnp.ones((N, d_in), jnp.float32)

    # Perf: hoist the feature transform out of the kernel (computed once).
    t = jnp.dot(h.astype(jnp.float32), weight.astype(jnp.float32))

    # Perf: 0/1 adjacency is exact in int8 -> 4x less HBM traffic on the
    # bandwidth-bound input.  Weighted adjacencies must stay in f32.
    adj_stream = adj.astype(jnp.int8) if adj_is_binary else adj.astype(jnp.float32)
    itemsize = adj_stream.dtype.itemsize

    # Lane-dense output: pad last (readout) layer columns to a multiple of 128.
    d_out_pad = _round_up(d_out, 128)
    if d_out_pad != d_out:
        w3 = jnp.pad(w3, ((0, 0), (0, d_out_pad - d_out)))
        b3 = jnp.pad(b3, ((0, 0), (0, d_out_pad - d_out)))

    # Row tile: multiple of 32 (int8 sublane tile, covers f32's 8).
    tn = max(32, min(_round_up(tn, 32), _round_up(N, 32)))
    # K tile: multiple of 128 (int8 lane tile; also covers f32's sublane 8 for t).
    tk = max(128, min(_round_up(tk, 128), _round_up(N, 128)))

    # Shrink tiles to a conservative VMEM budget (v7x only has 64 MiB physical).
    budget = 40 * 1024 * 1024
    while _vmem_bytes(tn, tk, d_out, d_out_pad, h1, h2, itemsize) > budget:
        if tk > 128:
            tk = _round_up(tk // 2, 128)
        elif tn > 32:
            tn = _round_up(tn // 2, 32)
        else:
            break

    num_row_tiles = pl.cdiv(N, tn)
    num_k_tiles = pl.cdiv(N, tk)
    n_pad = num_row_tiles * tn
    k_pad = num_k_tiles * tk

    # Pad tail tiles (rows and contraction dim) so nothing is silently dropped.
    if n_pad != N or k_pad != N:
        adj_stream = jnp.pad(adj_stream, ((0, n_pad - N), (0, k_pad - N)))
    if k_pad != N:
        t = jnp.pad(t, ((0, k_pad - N), (0, 0)))

    usage = _vmem_bytes(tn, tk, d_out, d_out_pad, h1, h2, itemsize)
    vmem_limit = int(min(max(usage + 4 * 1024 * 1024, 16 * 1024 * 1024),
                         48 * 1024 * 1024))

    full = lambda i, k: (0, 0)   # whole-array block, same every step (fetched once)

    out = pl.pallas_call(
        categnn_kernel,
        out_shape=jax.ShapeDtypeStruct((n_pad, d_out_pad), jnp.float32),
        grid_spec=pltpu.PrefetchScalarGridSpec(
            num_scalar_prefetch=0,
            grid=(num_row_tiles, num_k_tiles),
            in_specs=[
                pl.BlockSpec((tn, tk), lambda i, k: (i, k)),      # adj tile (streamed)
                pl.BlockSpec((tk, d_out), lambda i, k: (k, 0)),   # transformed features
                pl.BlockSpec(w1.shape, full),                     # MLPReadout layer 0
                pl.BlockSpec(b1.shape, full),
                pl.BlockSpec(w2.shape, full),                     # MLPReadout layer 1
                pl.BlockSpec(b2.shape, full),
                pl.BlockSpec(w3.shape, full),                     # MLPReadout layer 2
                pl.BlockSpec(b3.shape, full),
            ],
            out_specs=pl.BlockSpec((tn, d_out_pad), lambda i, k: (i, 0)),
            scratch_shapes=[pltpu.VMEM((tn, d_out), jnp.float32)],
        ),
        compiler_params=pltpu.CompilerParams(
            dimension_semantics=("parallel", "arbitrary"),
            vmem_limit_bytes=vmem_limit),
    )(adj_stream, t, w1, b1, w2, b2, w3, b3)

    return out[:N, :d_out]


def reference(adj, h, weight, w1, b1, w2, b2, w3, b3):
    t = h @ weight
    agg = adj @ t
    y = jnp.maximum(agg @ w1 + b1, 0.0)
    y = jnp.maximum(y @ w2 + b2, 0.0)
    return y @ w3 + b3


if __name__ == "__main__":
    # Small shapes; N deliberately NOT a multiple of the tile sizes to exercise
    # the padded tail tiles on both grid axes.
    N = 300            # number of nodes
    D_IN = 16          # node_feature_dim
    D_OUT = 32         # output_dim
    H1, H2 = D_OUT // 2, D_OUT // 4   # MLPReadout hidden dims (L=2)

    key = jax.random.PRNGKey(0)
    k_adj, k_h, k_w, k1, k2, k3, kb1, kb2, kb3 = jax.random.split(key, 9)

    # Deterministic synthetic parameters (matching __init__ shapes).
    weight = jax.random.normal(k_w, (D_IN, D_OUT), jnp.float32)   # torch.randn
    w1 = jax.random.normal(k1, (D_OUT, H1), jnp.float32) * 0.1
    b1 = jax.random.normal(kb1, (1, H1), jnp.float32) * 0.1
    w2 = jax.random.normal(k2, (H1, H2), jnp.float32) * 0.1
    b2 = jax.random.normal(kb2, (1, H2), jnp.float32) * 0.1
    w3 = jax.random.normal(k3, (H2, D_OUT), jnp.float32) * 0.1
    b3 = jax.random.normal(kb3, (1, D_OUT), jnp.float32) * 0.1

    # Synthetic symmetric 0/1 adjacency matrix.
    a = (jax.random.uniform(k_adj, (N, N)) < 0.1).astype(jnp.float32)
    adj = jnp.maximum(a, a.T)

    # Path 1: h is None -> all-ones node features (module default path).
    out = categnn_layer(adj, weight, w1, b1, w2, b2, w3, b3, tn=128, tk=256)
    out = jax.block_until_ready(out)
    h_ones = jnp.ones((N, D_IN), jnp.float32)
    ref = reference(adj, h_ones, weight, w1, b1, w2, b2, w3, b3)
    assert out.shape == (N, D_OUT)
    assert jnp.allclose(out, ref, atol=1e-3, rtol=1e-3), "mismatch (h=None path)"

    # Path 2: explicit node features.
    h = jax.random.normal(k_h, (N, D_IN), jnp.float32)
    out2 = jax.block_until_ready(
        categnn_layer(adj, weight, w1, b1, w2, b2, w3, b3, h=h, tn=256, tk=1024))
    ref2 = reference(adj, h, weight, w1, b1, w2, b2, w3, b3)
    assert jnp.allclose(out2, ref2, atol=1e-3, rtol=1e-3), "mismatch (explicit h)"

    print("KERNEL_OK")
</pallas_src>

<mosaic_0001>
module attributes {stable_mosaic.version = 11 : i64} {
  func.func @categnn_kernel(%arg0: i32, %arg1: i32, %arg2: memref<128x256xi8, #tpu.memory_space<vmem>>, %arg3: memref<256x32xf32, #tpu.memory_space<vmem>>, %arg4: memref<32x16xf32, #tpu.memory_space<vmem>>, %arg5: memref<1x16xf32, #tpu.memory_space<vmem>>, %arg6: memref<16x8xf32, #tpu.memory_space<vmem>>, %arg7: memref<1x8xf32, #tpu.memory_space<vmem>>, %arg8: memref<8x128xf32, #tpu.memory_space<vmem>>, %arg9: memref<1x128xf32, #tpu.memory_space<vmem>>, %arg10: memref<128x128xf32, #tpu.memory_space<vmem>>, %arg11: memref<128x32xf32, #tpu.memory_space<vmem>>) attributes {dimension_semantics = [#tpu.dimension_semantics<parallel>, #tpu.dimension_semantics<arbitrary>], iteration_bounds = array<i64: 3, 2>, scalar_prefetch = 0 : i64, scratch_operands = 1 : i64, tpu.core_type = #tpu.core_type<tc>, window_params = [{transform_indices = @transform_0, window_bounds = array<i64: 128, 256>}, {transform_indices = @transform_1, window_bounds = array<i64: 256, 32>}, {pipeline_mode = #tpu.pipeline_mode<synchronous>, transform_indices = @transform_2, window_bounds = array<i64: 32, 16>}, {pipeline_mode = #tpu.pipeline_mode<synchronous>, transform_indices = @transform_3, window_bounds = array<i64: 1, 16>}, {pipeline_mode = #tpu.pipeline_mode<synchronous>, transform_indices = @transform_4, window_bounds = array<i64: 16, 8>}, {pipeline_mode = #tpu.pipeline_mode<synchronous>, transform_indices = @transform_5, window_bounds = array<i64: 1, 8>}, {pipeline_mode = #tpu.pipeline_mode<synchronous>, transform_indices = @transform_6, window_bounds = array<i64: 8, 128>}, {pipeline_mode = #tpu.pipeline_mode<synchronous>, transform_indices = @transform_7, window_bounds = array<i64: 1, 128>}, {transform_indices = @transform_8, window_bounds = array<i64: 128, 128>}]} {
    %c0_i32 = arith.constant 0 : i32
    %0 = arith.cmpi eq, %arg1, %c0_i32 : i32
    %1 = arith.extui %0 : i1 to i32
    %c0_i32_0 = arith.constant 0 : i32
    %2 = arith.cmpi ne, %1, %c0_i32_0 : i32
    scf.if %2 {
      %cst_9 = arith.constant 0.000000e+00 : f32
      %13 = vector.broadcast %cst_9 : f32 to vector<128x32xf32>
      %c0_10 = arith.constant 0 : index
      %c0_11 = arith.constant 0 : index
      %14 = vector.load %arg11[%c0_10, %c0_11] : memref<128x32xf32, #tpu.memory_space<vmem>>, vector<128x32xf32>
      tpu.vector_store %arg11[%c0_10, %c0_11], %13 {strides = array<i32>} : memref<128x32xf32, #tpu.memory_space<vmem>>, vector<128x32xf32>,
    } else {
    }
    %c0 = arith.constant 0 : index
    %c0_1 = arith.constant 0 : index
    %3 = vector.load %arg2[%c0, %c0_1] : memref<128x256xi8, #tpu.memory_space<vmem>>, vector<128x256xi8>
    %4 = arith.sitofp %3 : vector<128x256xi8> to vector<128x256xf32>
    %c0_2 = arith.constant 0 : index
    %c0_3 = arith.constant 0 : index
    %5 = vector.load %arg11[%c0_2, %c0_3] : memref<128x32xf32, #tpu.memory_space<vmem>>, vector<128x32xf32>
    %c0_4 = arith.constant 0 : index
    %c0_5 = arith.constant 0 : index
    %6 = vector.load %arg3[%c0_4, %c0_5] : memref<256x32xf32, #tpu.memory_space<vmem>>, vector<256x32xf32>
    %cst = arith.constant dense<0.000000e+00> : vector<128x32xf32>
    %7 = tpu.matmul %4, %6, %cst {dimension_numbers = #tpu.dot_dimension_numbers<[1], [0], [0], [1], [0, 0, 1, 1], [], []>} : vector<128x256xf32>, vector<256x32xf32>, vector<128x32xf32> -> vector<128x32xf32>
    %8 = arith.addf %5, %7 : vector<128x32xf32>
    %c0_6 = arith.constant 0 : index
    %c0_7 = arith.constant 0 : index
    %9 = vector.load %arg11[%c0_6, %c0_7] : memref<128x32xf32, #tpu.memory_space<vmem>>, vector<128x32xf32>
    tpu.vector_store %arg11[%c0_6, %c0_7], %8 {strides = array<i32>} : memref<128x32xf32, #tpu.memory_space<vmem>>, vector<128x32xf32>,
    %c1_i32 = arith.constant 1 : i32
    %10 = arith.cmpi eq, %arg1, %c1_i32 : i32
    %11 = arith.extui %10 : i1 to i32
    %c0_i32_8 = arith.constant 0 : i32
    %12 = arith.cmpi ne, %11, %c0_i32_8 : i32
    scf.if %12 {
      %c0_9 = arith.constant 0 : index
      %c0_10 = arith.constant 0 : index
      %13 = vector.load %arg11[%c0_9, %c0_10] : memref<128x32xf32, #tpu.memory_space<vmem>>, vector<128x32xf32>
      %c0_11 = arith.constant 0 : index
      %c0_12 = arith.constant 0 : index
      %14 = vector.load %arg4[%c0_11, %c0_12] : memref<32x16xf32, #tpu.memory_space<vmem>>, vector<32x16xf32>
      %cst_13 = arith.constant dense<0.000000e+00> : vector<128x16xf32>
      %15 = tpu.matmul %13, %14, %cst_13 {dimension_numbers = #tpu.dot_dimension_numbers<[1], [0], [0], [1], [0, 0, 1, 1], [], []>} : vector<128x32xf32>, vector<32x16xf32>, vector<128x16xf32> -> vector<128x16xf32>
      %c0_14 = arith.constant 0 : index
      %c0_15 = arith.constant 0 : index
      %16 = vector.load %arg5[%c0_14, %c0_15] : memref<1x16xf32, #tpu.memory_space<vmem>>, vector<1x16xf32>
      %17 = vector.broadcast %16 : vector<1x16xf32> to vector<128x16xf32>
      %18 = arith.addf %15, %17 : vector<128x16xf32>
      %cst_16 = arith.constant 0.000000e+00 : f32
      %19 = vector.broadcast %cst_16 : f32 to vector<128x16xf32>
      %20 = arith.maximumf %18, %19 : vector<128x16xf32>
      %c0_17 = arith.constant 0 : index
      %c0_18 = arith.constant 0 : index
      %21 = vector.load %arg6[%c0_17, %c0_18] : memref<16x8xf32, #tpu.memory_space<vmem>>, vector<16x8xf32>
      %cst_19 = arith.constant dense<0.000000e+00> : vector<128x8xf32>
      %22 = tpu.matmul %20, %21, %cst_19 {dimension_numbers = #tpu.dot_dimension_numbers<[1], [0], [0], [1], [0, 0, 1, 1], [], []>} : vector<128x16xf32>, vector<16x8xf32>, vector<128x8xf32> -> vector<128x8xf32>
      %c0_20 = arith.constant 0 : index
      %c0_21 = arith.constant 0 : index
      %23 = vector.load %arg7[%c0_20, %c0_21] : memref<1x8xf32, #tpu.memory_space<vmem>>, vector<1x8xf32>
      %24 = vector.broadcast %23 : vector<1x8xf32> to vector<128x8xf32>
      %25 = arith.addf %22, %24 : vector<128x8xf32>
      %cst_22 = arith.constant 0.000000e+00 : f32
      %26 = vector.broadcast %cst_22 : f32 to vector<128x8xf32>
      %27 = arith.maximumf %25, %26 : vector<128x8xf32>
      %c0_23 = arith.constant 0 : index
      %c0_24 = arith.constant 0 : index
      %28 = vector.load %arg8[%c0_23, %c0_24] : memref<8x128xf32, #tpu.memory_space<vmem>>, vector<8x128xf32>
      %cst_25 = arith.constant dense<0.000000e+00> : vector<128x128xf32>
      %29 = tpu.matmul %27, %28, %cst_25 {dimension_numbers = #tpu.dot_dimension_numbers<[1], [0], [0], [1], [0, 0, 1, 1], [], []>} : vector<128x8xf32>, vector<8x128xf32>, vector<128x128xf32> -> vector<128x128xf32>
      %c0_26 = arith.constant 0 : index
      %c0_27 = arith.constant 0 : index
      %30 = vector.load %arg9[%c0_26, %c0_27] : memref<1x128xf32, #tpu.memory_space<vmem>>, vector<1x128xf32>
      %31 = vector.broadcast %30 : vector<1x128xf32> to vector<128x128xf32>
      %32 = arith.addf %29, %31 : vector<128x128xf32>
      %c0_28 = arith.constant 0 : index
      %c0_29 = arith.constant 0 : index
      %33 = vector.load %arg10[%c0_28, %c0_29] : memref<128x128xf32, #tpu.memory_space<vmem>>, vector<128x128xf32>
      tpu.vector_store %arg10[%c0_28, %c0_29], %32 {strides = array<i32>} : memref<128x128xf32, #tpu.memory_space<vmem>>, vector<128x128xf32>,
    } else {
    }
    return
  }
  func.func @transform_0(%arg0: i32, %arg1: i32) -> (i32, i32) {
    %c0_i32 = arith.constant 0 : i32
    return %arg0, %arg1 : i32, i32
  }
  func.func @transform_1(%arg0: i32, %arg1: i32) -> (i32, i32) {
    %c0_i32 = arith.constant 0 : i32
    %c0_i32_0 = arith.constant 0 : i32
    return %arg1, %c0_i32 : i32, i32
  }
  func.func @transform_2(%arg0: i32, %arg1: i32) -> (i32, i32) {
    %c0_i32 = arith.constant 0 : i32
    %c0_i32_0 = arith.constant 0 : i32
    %c0_i32_1 = arith.constant 0 : i32
    return %c0_i32, %c0_i32_0 : i32, i32
  }
  func.func @transform_3(%arg0: i32, %arg1: i32) -> (i32, i32) {
    %c0_i32 = arith.constant 0 : i32
    %c0_i32_0 = arith.constant 0 : i32
    %c0_i32_1 = arith.constant 0 : i32
    return %c0_i32, %c0_i32_0 : i32, i32
  }
  func.func @transform_4(%arg0: i32, %arg1: i32) -> (i32, i32) {
    %c0_i32 = arith.constant 0 : i32
    %c0_i32_0 = arith.constant 0 : i32
    %c0_i32_1 = arith.constant 0 : i32
    return %c0_i32, %c0_i32_0 : i32, i32
  }
  func.func @transform_5(%arg0: i32, %arg1: i32) -> (i32, i32) {
    %c0_i32 = arith.constant 0 : i32
    %c0_i32_0 = arith.constant 0 : i32
    %c0_i32_1 = arith.constant 0 : i32
    return %c0_i32, %c0_i32_0 : i32, i32
  }
  func.func @transform_6(%arg0: i32, %arg1: i32) -> (i32, i32) {
    %c0_i32 = arith.constant 0 : i32
    %c0_i32_0 = arith.constant 0 : i32
    %c0_i32_1 = arith.constant 0 : i32
    return %c0_i32, %c0_i32_0 : i32, i32
  }
  func.func @transform_7(%arg0: i32, %arg1: i32) -> (i32, i32) {
    %c0_i32 = arith.constant 0 : i32
    %c0_i32_0 = arith.constant 0 : i32
    %c0_i32_1 = arith.constant 0 : i32
    return %c0_i32, %c0_i32_0 : i32, i32
  }
  func.func @transform_8(%arg0: i32, %arg1: i32) -> (i32, i32) {
    %c0_i32 = arith.constant 0 : i32
    %c0_i32_0 = arith.constant 0 : i32
    return %arg0, %c0_i32 : i32, i32
  }
}

</mosaic_0001>

<llo_original>
// kernel: tpu_custom_call.1
$region0: #{tpu_custom_call.1}
  #allocation0 [shape = 'u32[]', space=smem, size = 0x4, offset = 0x4, fixed_abs, tag = 'smem constant byte address 0x4 - core index']
  #allocation1 [shape = 'u32[144,128]{1,0:T(1,128)}', space=vmem, size = 0x12000, scoped, tag = 'internal scratch']
  #allocation2 [shape = 'f32[128,32]{1,0:T(8,128)}', space=vmem, size = 0x10000, scoped, tag = 'scratch operand']
  %s0 = inlined_call_operand.vmem [shape: s8[384,512], index: 0, kind: input, shape index: {}]
  %s1 = inlined_call_operand.vmem [shape: f32[512,32], index: 1, kind: input, shape index: {}]
  %s2 = inlined_call_operand.vmem [shape: f32[32,16], index: 2, kind: input, shape index: {}]
  %s3 = inlined_call_operand.vmem [shape: f32[1,16], index: 3, kind: input, shape index: {}]
  %s4 = inlined_call_operand.vmem [shape: f32[16,8], index: 4, kind: input, shape index: {}]
  %s5 = inlined_call_operand.vmem [shape: f32[1,8], index: 5, kind: input, shape index: {}]
  %s6 = inlined_call_operand.vmem [shape: f32[8,128], index: 6, kind: input, shape index: {}]
  %s7 = inlined_call_operand.vmem [shape: f32[1,128], index: 7, kind: input, shape index: {}]
  %s8 = inlined_call_operand.hbm [shape: f32[384,128], index: 8, kind: output, shape index: {}]
  %s9 = sld [smem:[#allocation0]]
  $region96: #{tpu_custom_call.1} parent=0
    _
  %s11 = ssub.s32 1, %s9
  %s12 = scalar_select 0, %s11, %s9
  $region1: #{tpu_custom_call.1} parent=0
    #allocation3 [shape = 'u8[65536]{0}', space=vmem, size = 0x10000, scoped, tag = 'input window, operand 0']
    #allocation4 [shape = 'u8[131072]{0}', space=vmem, size = 0x20000, scoped, tag = 'output window, operand 0']
    #allocation5 [shape = 's32[2]{0}', space=sflag, size = 0x8, scoped, tag = 'scoped memory for tpu_custom_call.1']
    %13 = vsyncpa [#allocation5], 0
    %s14 = scalar_lea.sflag [#allocation5], 1
    %15 = vsyncpa %s14, 0
    loop: start=0, step=1, limit=8
    $region2: #{tpu_custom_call.1} parent=1 // loop_pre_header
      _
    $region3: #{tpu_custom_call.1} parent=1 // loop_header
      %s17 = sphi 0, %s21
      %p18 = scmp.ge.s32.totalorder %s17, 8
      %s24 = sphi 0, %s36
      %s25 = sphi 0, %s32
      %s26 = sphi 0, %s24
      %s27 = sphi 0, %s25
      %s28 = sphi 0, %s26
      %s29 = sphi 0, %s27
      %s41 = sphi 0, %s43
      %s44 = sphi 0, %s41
      %s45 = sphi 0, %s44
      %s61 = sphi 0, %s45
      %s67 = sphi 0, %s69
      %s70 = sphi 0, %s67
      %s71 = sphi 0, %s70
      %s87 = sphi 0, %s71
      %s91 = sphi 0, %s91
      %s93 = sphi 0, %s91
      %s94 = sphi 0, %s93
      %s108 = sphi 0, %s94
      %s112 = sphi 0, %s112
      %s114 = sphi 0, %s112
      %s115 = sphi 0, %s114
      %s129 = sphi 0, %s115
      %s133 = sphi 0, %s133
      %s135 = sphi 0, %s133
      %s136 = sphi 0, %s135
      %s150 = sphi 0, %s136
      %s154 = sphi 0, %s154
      %s156 = sphi 0, %s154
      %s157 = sphi 0, %s156
      %s171 = sphi 0, %s157
      %s175 = sphi 0, %s175
      %s177 = sphi 0, %s175
      %s178 = sphi 0, %s177
      %s192 = sphi 0, %s178
      %s196 = sphi 0, %s196
      %s198 = sphi 0, %s196
      %s199 = sphi 0, %s198
      %s213 = sphi 0, %s199
      %s219 = sphi 0, %s221
      %s222 = sphi 0, %s219
      %s223 = sphi 0, %s222
      %s239 = sphi 0, %s223
    $region4: #{tpu_custom_call.1} parent=1 // loop_header_branch
      %20 = sbr.rel (%p18) target = $region8
    $region5: #{tpu_custom_call.1} parent=1 // loop_body
      %s22 = ssub.s32 %s17, 1
      %s23 = ssub.s32 %s17, 2
      %s30 = sadd.s32 1, %s25
      %p31 = scmp.ge.s32.totalorder %s30, 2
      %s32 = scalar_select %p31, 0, %s30
      %s33 = sadd.s32 1, %s24
      %s34 = scalar_select %p31, %s33, %s24
      %p35 = scmp.ge.s32.totalorder %s34, 3
      %s36 = scalar_select %p35, 0, %s34
      %s37 = ssub.s32 %s24, %s36
      %s38 = ssub.s32 %s25, %s32
      %s39 = sor.u32 %s37, %s38
      %p40 = scmp.eq.s32.totalorder %s39, 0
      %s42 = sadd.s32 %s41, 1
      %s43 = scalar_select %p40, %s41, %s42
      %p46 = pneg %p40
      %p47 = scmp.eq.s32.totalorder %s17, 5
      %p48 = por %p46, %p47
      %p49 = scmp.ne.s32.totalorder %s41, %s44
      %p50 = scmp.eq.s32.totalorder %s17, 0
      %p51 = por %p49, %p50
      %p52 = scmp.ne.s32.totalorder %s41, %s44
      %p53 = scmp.eq.s32.totalorder %s22, 5
      %p54 = por %p52, %p53
      %p55 = scmp.ne.s32.totalorder %s44, %s45
      %p56 = scmp.eq.s32.totalorder %s22, 0
      %p57 = por %p55, %p56
      %p58 = scmp.ne.s32.totalorder %s44, %s45
      %p59 = scmp.eq.s32.totalorder %s23, 5
      %p60 = por %p58, %p59
      %p62 = scmp.ne.s32.totalorder %s45, %s61
      %p63 = scmp.eq.s32.totalorder %s23, 0
      %p64 = por %p62, %p63
      %s65 = ssub.s32 %s25, %s32
      %p66 = scmp.eq.s32.totalorder %s65, 0
      %s68 = sadd.s32 %s67, 1
      %s69 = scalar_select %p66, %s67, %s68
      %p72 = pneg %p66
      %p73 = scmp.eq.s32.totalorder %s17, 5
      %p74 = por %p72, %p73
      %p75 = scmp.ne.s32.totalorder %s67, %s70
      %p76 = scmp.eq.s32.totalorder %s17, 0
      %p77 = por %p75, %p76
      %p78 = scmp.ne.s32.totalorder %s67, %s70
      %p79 = scmp.eq.s32.totalorder %s22, 5
      %p80 = por %p78, %p79
      %p81 = scmp.ne.s32.totalorder %s70, %s71
      %p82 = scmp.eq.s32.totalorder %s22, 0
      %p83 = por %p81, %p82
      %p84 = scmp.ne.s32.totalorder %s70, %s71
      %p85 = scmp.eq.s32.totalorder %s23, 5
      %p86 = por %p84, %p85
      %p88 = scmp.ne.s32.totalorder %s71, %s87
      %p89 = scmp.eq.s32.totalorder %s23, 0
      %p90 = por %p88, %p89
      %s92 = sadd.s32 %s91, 1
      %p95 = scmp.eq.s32.totalorder %s17, 5
      %p96 = scmp.ne.s32.totalorder %s91, %s93
      %p97 = scmp.eq.s32.totalorder %s17, 0
      %p98 = por %p96, %p97
      %p99 = scmp.ne.s32.totalorder %s91, %s93
      %p100 = scmp.eq.s32.totalorder %s22, 5
      %p101 = por %p99, %p100
      %p102 = scmp.ne.s32.totalorder %s93, %s94
      %p103 = scmp.eq.s32.totalorder %s22, 0
      %p104 = por %p102, %p103
      %p105 = scmp.ne.s32.totalorder %s93, %s94
      %p106 = scmp.eq.s32.totalorder %s23, 5
      %p107 = por %p105, %p106
      %p109 = scmp.ne.s32.totalorder %s94, %s108
      %p110 = scmp.eq.s32.totalorder %s23, 0
      %p111 = por %p109, %p110
      %s113 = sadd.s32 %s112, 1
      %p116 = scmp.eq.s32.totalorder %s17, 5
      %p117 = scmp.ne.s32.totalorder %s112, %s114
      %p118 = scmp.eq.s32.totalorder %s17, 0
      %p119 = por %p117, %p118
      %p120 = scmp.ne.s32.totalorder %s112, %s114
      %p121 = scmp.eq.s32.totalorder %s22, 5
      %p122 = por %p120, %p121
      %p123 = scmp.ne.s32.totalorder %s114, %s115
      %p124 = scmp.eq.s32.totalorder %s22, 0
      %p125 = por %p123, %p124
      %p126 = scmp.ne.s32.totalorder %s114, %s115
      %p127 = scmp.eq.s32.totalorder %s23, 5
      %p128 = por %p126, %p127
      %p130 = scmp.ne.s32.totalorder %s115, %s129
      %p131 = scmp.eq.s32.totalorder %s23, 0
      %p132 = por %p130, %p131
      %s134 = sadd.s32 %s133, 1
      %p137 = scmp.eq.s32.totalorder %s17, 5
      %p138 = scmp.ne.s32.totalorder %s133, %s135
      %p139 = scmp.eq.s32.totalorder %s17, 0
      %p140 = por %p138, %p139
      %p141 = scmp.ne.s32.totalorder %s133, %s135
      %p142 = scmp.eq.s32.totalorder %s22, 5
      %p143 = por %p141, %p142
      %p144 = scmp.ne.s32.totalorder %s135, %s136
      %p145 = scmp.eq.s32.totalorder %s22, 0
      %p146 = por %p144, %p145
      %p147 = scmp.ne.s32.totalorder %s135, %s136
      %p148 = scmp.eq.s32.totalorder %s23, 5
      %p149 = por %p147, %p148
      %p151 = scmp.ne.s32.totalorder %s136, %s150
      %p152 = scmp.eq.s32.totalorder %s23, 0
      %p153 = por %p151, %p152
      %s155 = sadd.s32 %s154, 1
      %p158 = scmp.eq.s32.totalorder %s17, 5
      %p159 = scmp.ne.s32.totalorder %s154, %s156
      %p160 = scmp.eq.s32.totalorder %s17, 0
      %p161 = por %p159, %p160
      %p162 = scmp.ne.s32.totalorder %s154, %s156
      %p163 = scmp.eq.s32.totalorder %s22, 5
      %p164 = por %p162, %p163
      %p165 = scmp.ne.s32.totalorder %s156, %s157
      %p166 = scmp.eq.s32.totalorder %s22, 0
      %p167 = por %p165, %p166
      %p168 = scmp.ne.s32.totalorder %s156, %s157
      %p169 = scmp.eq.s32.totalorder %s23, 5
      %p170 = por %p168, %p169
      %p172 = scmp.ne.s32.totalorder %s157, %s171
      %p173 = scmp.eq.s32.totalorder %s23, 0
      %p174 = por %p172, %p173
      %s176 = sadd.s32 %s175, 1
      %p179 = scmp.eq.s32.totalorder %s17, 5
      %p180 = scmp.ne.s32.totalorder %s175, %s177
      %p181 = scmp.eq.s32.totalorder %s17, 0
      %p182 = por %p180, %p181
      %p183 = scmp.ne.s32.totalorder %s175, %s177
      %p184 = scmp.eq.s32.totalorder %s22, 5
      %p185 = por %p183, %p184
      %p186 = scmp.ne.s32.totalorder %s177, %s178
      %p187 = scmp.eq.s32.totalorder %s22, 0
      %p188 = por %p186, %p187
      %p189 = scmp.ne.s32.totalorder %s177, %s178
      %p190 = scmp.eq.s32.totalorder %s23, 5
      %p191 = por %p189, %p190
      %p193 = scmp.ne.s32.totalorder %s178, %s192
      %p194 = scmp.eq.s32.totalorder %s23, 0
      %p195 = por %p193, %p194
      %s197 = sadd.s32 %s196, 1
      %p200 = scmp.eq.s32.totalorder %s17, 5
      %p201 = scmp.ne.s32.totalorder %s196, %s198
      %p202 = scmp.eq.s32.totalorder %s17, 0
      %p203 = por %p201, %p202
      %p204 = scmp.ne.s32.totalorder %s196, %s198
      %p205 = scmp.eq.s32.totalorder %s22, 5
      %p206 = por %p204, %p205
      %p207 = scmp.ne.s32.totalorder %s198, %s199
      %p208 = scmp.eq.s32.totalorder %s22, 0
      %p209 = por %p207, %p208
      %p210 = scmp.ne.s32.totalorder %s198, %s199
      %p211 = scmp.eq.s32.totalorder %s23, 5
      %p212 = por %p210, %p211
      %p214 = scmp.ne.s32.totalorder %s199, %s213
      %p215 = scmp.eq.s32.totalorder %s23, 0
      %p216 = por %p214, %p215
      %s217 = ssub.s32 %s24, %s36
      %p218 = scmp.eq.s32.totalorder %s217, 0
      %s220 = sadd.s32 %s219, 1
      %s221 = scalar_select %p218, %s219, %s220
      %p224 = pneg %p218
      %p225 = scmp.eq.s32.totalorder %s17, 5
      %p226 = por %p224, %p225
      %p227 = scmp.ne.s32.totalorder %s219, %s222
      %p228 = scmp.eq.s32.totalorder %s17, 0
      %p229 = por %p227, %p228
      %p230 = scmp.ne.s32.totalorder %s219, %s222
      %p231 = scmp.eq.s32.totalorder %s22, 5
      %p232 = por %p230, %p231
      %p233 = scmp.ne.s32.totalorder %s222, %s223
      %p234 = scmp.eq.s32.totalorder %s22, 0
      %p235 = por %p233, %p234
      %p236 = scmp.ne.s32.totalorder %s222, %s223
      %p237 = scmp.eq.s32.totalorder %s23, 5
      %p238 = por %p236, %p237
      %p240 = scmp.ne.s32.totalorder %s223, %s239
      %p241 = scmp.eq.s32.totalorder %s23, 0
      %p242 = por %p240, %p241
      %p243 = scmp.le.s32.totalorder 1, %s17
      %p244 = scmp.lt.s32.totalorder %s17, 7
      %p245 = pnand %p243, %p244
      %p246 = pneg %p245
      // Predicated region
      $region9: #{tpu_custom_call.1} parent=5 // pred_check
        _
      $region10: #{tpu_custom_call.1} parent=5 // pred_check_branch
        %248 = sbr.rel (%p245) target = $region12
      $region11: #{tpu_custom_call.1} parent=5 // pred_region
        %s249 = ssub.s32 %s17, 1
        // Predicated region
        $region13: #{tpu_custom_call.1} parent=11 // pred_check
          %p250 = pneg %p104
        $region14: #{tpu_custom_call.1} parent=11 // pred_check_branch
          %252 = sbr.rel (%p250) target = $region16
        $region15: #{tpu_custom_call.1} parent=11 // pred_region
          _
        $region16: #{tpu_custom_call.1} parent=11 // pred_fallthru
          _
        // Predicated region
        $region17: #{tpu_custom_call.1} parent=11 // pred_check
          %p253 = pneg %p125
        $region18: #{tpu_custom_call.1} parent=11 // pred_check_branch
          %255 = sbr.rel (%p253) target = $region20
        $region19: #{tpu_custom_call.1} parent=11 // pred_region
          _
        $region20: #{tpu_custom_call.1} parent=11 // pred_fallthru
          _
        // Predicated region
        $region21: #{tpu_custom_call.1} parent=11 // pred_check
          %p256 = pneg %p146
        $region22: #{tpu_custom_call.1} parent=11 // pred_check_branch
          %258 = sbr.rel (%p256) target = $region24
        $region23: #{tpu_custom_call.1} parent=11 // pred_region
          _
        $region24: #{tpu_custom_call.1} parent=11 // pred_fallthru
          _
        // Predicated region
        $region25: #{tpu_custom_call.1} parent=11 // pred_check
          %p259 = pneg %p167
        $region26: #{tpu_custom_call.1} parent=11 // pred_check_branch
          %261 = sbr.rel (%p259) target = $region28
        $region27: #{tpu_custom_call.1} parent=11 // pred_region
          _
        $region28: #{tpu_custom_call.1} parent=11 // pred_fallthru
          _
        // Predicated region
        $region29: #{tpu_custom_call.1} parent=11 // pred_check
          %p262 = pneg %p188
        $region30: #{tpu_custom_call.1} parent=11 // pred_check_branch
          %264 = sbr.rel (%p262) target = $region32
        $region31: #{tpu_custom_call.1} parent=11 // pred_region
          _
        $region32: #{tpu_custom_call.1} parent=11 // pred_fallthru
          _
        // Predicated region
        $region33: #{tpu_custom_call.1} parent=11 // pred_check
          %p265 = pneg %p209
        $region34: #{tpu_custom_call.1} parent=11 // pred_check_branch
          %267 = sbr.rel (%p265) target = $region36
        $region35: #{tpu_custom_call.1} parent=11 // pred_region
          _
        $region36: #{tpu_custom_call.1} parent=11 // pred_fallthru
          _
      $region12: #{tpu_custom_call.1} parent=5 // pred_fallthru
        _
      %p268 = scmp.lt.s32.totalorder %s17, 6
      // Predicated region
      $region37: #{tpu_custom_call.1} parent=5 // pred_check
        %p269 = pneg %p268
      $region38: #{tpu_custom_call.1} parent=5 // pred_check_branch
        %271 = sbr.rel (%p269) target = $region40
      $region39: #{tpu_custom_call.1} parent=5 // pred_region
        // Predicated region
        $region41: #{tpu_custom_call.1} parent=39 // pred_check
          %p272 = pneg %p51
        $region42: #{tpu_custom_call.1} parent=39 // pred_check_branch
          %274 = sbr.rel (%p272) target = $region44
        $region43: #{tpu_custom_call.1} parent=39 // pred_region
          %s275 = sand.u32 %s41, 1
          %s276 = sand.u32 %s41, 1
          %s277 = smul.addr %s276, 64
          %s278 = scalar_lea.vmem [#allocation3], %s277
          %s279 = smul.u32 4, %s24
          %s280 = smul.u32 2, %s25
          %s281 = smul.addr %s279, 4
          %s282 = sadd.s32 %s280, %s281
          %s283 = smul.addr %s282, 8
          %s284 = scalar_lea.vmem %s0, %s283
          // Predicated region
          $region45: #{tpu_custom_call.1} parent=43 // pred_check
            _
          $region46: #{tpu_custom_call.1} parent=43 // pred_check_branch
            %286 = sbr.rel (0) target = $region48
          $region47: #{tpu_custom_call.1} parent=43 // pred_region
            // Predicated region
            $region49: #{tpu_custom_call.1} parent=47 // pred_check
              _
            $region50: #{tpu_custom_call.1} parent=47 // pred_check_branch
              %288 = sbr.rel (0) target = $region52
            $region51: #{tpu_custom_call.1} parent=47 // pred_region
              loop: start=0, step=1, limit=1
              $region53: #{tpu_custom_call.1} parent=51 // loop_pre_header
                _
              $region54: #{tpu_custom_call.1} parent=51 // loop_header
                %s290 = sphi 0, %s294
                %p291 = scmp.ge.s32.totalorder %s290, 1
                %s295 = sphi %s284, %s284
                %s296 = sphi %s278, %s278
              $region55: #{tpu_custom_call.1} parent=51 // loop_header_branch
                %293 = sbr.rel (%p291) target = $region59
              $region56: #{tpu_custom_call.1} parent=51 // loop_body
                %v297 = vld [vmem:[%s295] sm:$0xff]
                %298 = vst [vmem:[%s296] sm:$0xff] %v297
                %v299 = vld [vmem:[%s295 + $0x8] sm:$0xff]
                %300 = vst [vmem:[%s296 + $0x8] sm:$0xff] %v299
                %v301 = vld [vmem:[%s295 + $0x20] sm:$0xff]
                %302 = vst [vmem:[%s296 + $0x10] sm:$0xff] %v301
                %v303 = vld [vmem:[%s295 + $0x28] sm:$0xff]
                %304 = vst [vmem:[%s296 + $0x18] sm:$0xff] %v303
                %v305 = vld [vmem:[%s295 + $0x40] sm:$0xff]
                %306 = vst [vmem:[%s296 + $0x20] sm:$0xff] %v305
                %v307 = vld [vmem:[%s295 + $0x48] sm:$0xff]
                %308 = vst [vmem:[%s296 + $0x28] sm:$0xff] %v307
                %v309 = vld [vmem:[%s295 + $0x60] sm:$0xff]
                %310 = vst [vmem:[%s296 + $0x30] sm:$0xff] %v309
                %v311 = vld [vmem:[%s295 + $0x68] sm:$0xff]
                %312 = vst [vmem:[%s296 + $0x38] sm:$0xff] %v311
              $region57: #{tpu_custom_call.1} parent=51 // loop_footer
                %s294 = sadd.s32 1, %s290
              $region58: #{tpu_custom_call.1} parent=51 // loop_footer_branch
                %289 = sbr.rel target = $region54
              $region59: #{tpu_custom_call.1} parent=51 // loop_exit
                _
            $region52: #{tpu_custom_call.1} parent=47 // pred_fallthru
              _
            // Predicated region
            $region60: #{tpu_custom_call.1} parent=47 // pred_check
              _
            $region61: #{tpu_custom_call.1} parent=47 // pred_check_branch
              %314 = sbr.rel target = $region63
            $region62: #{tpu_custom_call.1} parent=47 // pred_region
              _
            $region63: #{tpu_custom_call.1} parent=47 // pred_fallthru
              _
          $region48: #{tpu_custom_call.1} parent=43 // pred_fallthru
            _
          %315 = vnop
        $region44: #{tpu_custom_call.1} parent=39 // pred_fallthru
          _
        // Predicated region
        $region64: #{tpu_custom_call.1} parent=39 // pred_check
          %p316 = pneg %p77
        $region65: #{tpu_custom_call.1} parent=39 // pred_check_branch
          %318 = sbr.rel (%p316) target = $region67
        $region66: #{tpu_custom_call.1} parent=39 // pred_region
          %s319 = smul.u32 32, %s25
          %p320 = scmp.lt.s32.totalorder %s319, 63
          %s321 = scalar_select %p320, %s319, 63
          %s322 = smul.addr %s321, 8
          %s323 = scalar_lea.vmem %s1, %s322
          %s324 = smul.u32 32, %s25
        $region67: #{tpu_custom_call.1} parent=39 // pred_fallthru
          _
      $region40: #{tpu_custom_call.1} parent=5 // pred_fallthru
        _
      %p325 = scmp.le.s32.totalorder 1, %s17
      %p326 = scmp.lt.s32.totalorder %s17, 7
      %p327 = pnand %p325, %p326
      %p328 = pneg %p327
      // Predicated region
      $region68: #{tpu_custom_call.1} parent=5 // pred_check
        _
      $region69: #{tpu_custom_call.1} parent=5 // pred_check_branch
        %330 = sbr.rel (%p327) target = $region71
      $region70: #{tpu_custom_call.1} parent=5 // pred_region
        %s331 = ssub.s32 %s17, 1
        %s332 = sand.u32 %s44, 1
        %s333 = sand.u32 %s44, 1
        %s334 = smul.addr %s333, 64
        %s335 = scalar_lea.vmem [#allocation3], %s334
        // Predicated region
        $region72: #{tpu_custom_call.1} parent=70 // pred_check
          %p336 = pneg %p57
        $region73: #{tpu_custom_call.1} parent=70 // pred_check_branch
          %338 = sbr.rel (%p336) target = $region75
        $region74: #{tpu_custom_call.1} parent=70 // pred_region
          _
        $region75: #{tpu_custom_call.1} parent=70 // pred_fallthru
          _
        %s339 = sand.u32 %s44, 1
        %s340 = sand.u32 %s44, 1
        %s341 = smul.addr %s340, 64
        %s342 = scalar_lea.vmem [#allocation3], %s341
        %p343 = pneg %p57
        %p344 = pneg %p54
        %s345 = smul.u32 32, %s27
        %p346 = scmp.lt.s32.totalorder %s345, 63
        %s347 = scalar_select %p346, %s345, 63
        %s348 = smul.addr %s347, 8
        %s349 = scalar_lea.vmem %s1, %s348
        %p350 = pneg %p83
        %p351 = pneg %p80
        %p352 = pneg %p104
        %p353 = pneg %p101
        %p354 = pneg %p125
        %p355 = pneg %p122
        %p356 = pneg %p146
        %p357 = pneg %p143
        %p358 = pneg %p167
        %p359 = pneg %p164
        %p360 = pneg %p188
        %p361 = pneg %p185
        %p362 = pneg %p209
        %p363 = pneg %p206
        %p364 = pneg %p235
        %p365 = pneg %p232
        %s366 = sand.u32 %s222, 1
        %s367 = scalar_lea.sflag [#allocation5], %s366
        %s368 = sand.u32 %s222, 1
        %s369 = smul.addr %s368, 128
        %s370 = scalar_lea.vmem [#allocation4], %s369
        %s371 = smul.u32 4, %s26
        %s372 = smul.u32 2, %s27
        %s373 = smul.u32 32, %s27
        %p374 = scmp.lt.s32.totalorder %s373, 63
        %s375 = scalar_select %p374, %s373, 63
        %s376 = smul.addr %s375, 8
        %s377 = scalar_lea.vmem %s1, %s376
        %s378 = smul.u32 32, %s27
        %s379 = smul.u32 16, %s26
        %p380 = scmp.eq.s32.totalorder %s27, 0
        // Predicated region
        $region76: #{tpu_custom_call.1} parent=70 // pred_check
          %p381 = pneg %p380
        $region77: #{tpu_custom_call.1} parent=70 // pred_check_branch
          %383 = sbr.rel (%p381) target = $region79
        $region78: #{tpu_custom_call.1} parent=70 // pred_region
          %vm384 = vcmask 261120
          %385 = vst.msk [vmem:[#allocation2] sm:$0xff] %vm384, 0.0
          %386 = vst.msk [vmem:[#allocation2 + $0x8] sm:$0xff] %vm384, 0.0
          %387 = vst.msk [vmem:[#allocation2 + $0x10] sm:$0xff] %vm384, 0.0
          %388 = vst.msk [vmem:[#allocation2 + $0x18] sm:$0xff] %vm384, 0.0
          %389 = vst.msk [vmem:[#allocation2 + $0x20] sm:$0xff] %vm384, 0.0
          %390 = vst.msk [vmem:[#allocation2 + $0x28] sm:$0xff] %vm384, 0.0
          %391 = vst.msk [vmem:[#allocation2 + $0x30] sm:$0xff] %vm384, 0.0
          %392 = vst.msk [vmem:[#allocation2 + $0x38] sm:$0xff] %vm384, 0.0
          %393 = vst.msk [vmem:[#allocation2 + $0x40] sm:$0xff] %vm384, 0.0
          %394 = vst.msk [vmem:[#allocation2 + $0x48] sm:$0xff] %vm384, 0.0
          %395 = vst.msk [vmem:[#allocation2 + $0x50] sm:$0xff] %vm384, 0.0
          %396 = vst.msk [vmem:[#allocation2 + $0x58] sm:$0xff] %vm384, 0.0
          %397 = vst.msk [vmem:[#allocation2 + $0x60] sm:$0xff] %vm384, 0.0
          %398 = vst.msk [vmem:[#allocation2 + $0x68] sm:$0xff] %vm384, 0.0
          %399 = vst.msk [vmem:[#allocation2 + $0x70] sm:$0xff] %vm384, 0.0
          %400 = vst.msk [vmem:[#allocation2 + $0x78] sm:$0xff] %vm384, 0.0
        $region79: #{tpu_custom_call.1} parent=70 // pred_fallthru
          _
        %v401 = vld [vmem:[%s335] sm:$0xff]
        %v402 = vld [vmem:[%s335 + $0x8] sm:$0xff]
        %v403 = vld [vmem:[%s335 + $0x10] sm:$0xff]
        %v404 = vld [vmem:[%s335 + $0x18] sm:$0xff]
        %v405 = vld [vmem:[%s335 + $0x20] sm:$0xff]
        %v406 = vld [vmem:[%s335 + $0x28] sm:$0xff]
        %v407 = vld [vmem:[%s335 + $0x30] sm:$0xff]
        %v408 = vld [vmem:[%s335 + $0x38] sm:$0xff]
        %v409 = vunpack.c.0.s8 %v401
        %v410 = vunpack.c.0.s8 %v402
        %v411 = vunpack.c.1.s8 %v401
        %v412 = vunpack.c.1.s8 %v402
        %v413 = vunpack.c.2.s8 %v401
        %v414 = vunpack.c.2.s8 %v402
        %v415 = vunpack.c.3.s8 %v401
        %v416 = vunpack.c.3.s8 %v402
        %v417 = vunpack.c.0.s8 %v403
        %v418 = vunpack.c.0.s8 %v404
        %v419 = vunpack.c.1.s8 %v403
        %v420 = vunpack.c.1.s8 %v404
        %v421 = vunpack.c.2.s8 %v403
        %v422 = vunpack.c.2.s8 %v404
        %v423 = vunpack.c.3.s8 %v403
        %v424 = vunpack.c.3.s8 %v404
        %v425 = vunpack.c.0.s8 %v405
        %v426 = vunpack.c.0.s8 %v406
        %v427 = vunpack.c.1.s8 %v405
        %v428 = vunpack.c.1.s8 %v406
        %v429 = vunpack.c.2.s8 %v405
        %v430 = vunpack.c.2.s8 %v406
        %v431 = vunpack.c.3.s8 %v405
        %v432 = vunpack.c.3.s8 %v406
        %v433 = vunpack.c.0.s8 %v407
        %v434 = vunpack.c.0.s8 %v408
        %v435 = vunpack.c.1.s8 %v407
        %v436 = vunpack.c.1.s8 %v408
        %v437 = vunpack.c.2.s8 %v407
        %v438 = vunpack.c.2.s8 %v408
        %v439 = vunpack.c.3.s8 %v407
        %v440 = vunpack.c.3.s8 %v408
        %v441 = vcvt.s32.f32 %v409
        %v442 = vcvt.s32.f32 %v410
        %v443 = vcvt.s32.f32 %v411
        %v444 = vcvt.s32.f32 %v412
        %v445 = vcvt.s32.f32 %v413
        %v446 = vcvt.s32.f32 %v414
        %v447 = vcvt.s32.f32 %v415
        %v448 = vcvt.s32.f32 %v416
        %v449 = vcvt.s32.f32 %v417
        %v450 = vcvt.s32.f32 %v418
        %v451 = vcvt.s32.f32 %v419
        %v452 = vcvt.s32.f32 %v420
        %v453 = vcvt.s32.f32 %v421
        %v454 = vcvt.s32.f32 %v422
        %v455 = vcvt.s32.f32 %v423
        %v456 = vcvt.s32.f32 %v424
        %v457 = vcvt.s32.f32 %v425
        %v458 = vcvt.s32.f32 %v426
        %v459 = vcvt.s32.f32 %v427
        %v460 = vcvt.s32.f32 %v428
        %v461 = vcvt.s32.f32 %v429
        %v462 = vcvt.s32.f32 %v430
        %v463 = vcvt.s32.f32 %v431
        %v464 = vcvt.s32.f32 %v432
        %v465 = vcvt.s32.f32 %v433
        %v466 = vcvt.s32.f32 %v434
        %v467 = vcvt.s32.f32 %v435
        %v468 = vcvt.s32.f32 %v436
        %v469 = vcvt.s32.f32 %v437
        %v470 = vcvt.s32.f32 %v438
        %v471 = vcvt.s32.f32 %v439
        %v472 = vcvt.s32.f32 %v440
        %v473 = vld [vmem:[#allocation2] sm:$0xff]
        %v474 = vld [vmem:[#allocation2 + $0x8] sm:$0xff]
        %v475 = vld [vmem:[#allocation2 + $0x10] sm:$0xff]
        %v476 = vld [vmem:[#allocation2 + $0x18] sm:$0xff]
        %v477 = vld [vmem:[#allocation2 + $0x20] sm:$0xff]
        %v478 = vld [vmem:[#allocation2 + $0x28] sm:$0xff]
        %v479 = vld [vmem:[#allocation2 + $0x30] sm:$0xff]
        %v480 = vld [vmem:[#allocation2 + $0x38] sm:$0xff]
        %v481 = vld [vmem:[#allocation2 + $0x40] sm:$0xff]
        %v482 = vld [vmem:[#allocation2 + $0x48] sm:$0xff]
        %v483 = vld [vmem:[#allocation2 + $0x50] sm:$0xff]
        %v484 = vld [vmem:[#allocation2 + $0x58] sm:$0xff]
        %v485 = vld [vmem:[#allocation2 + $0x60] sm:$0xff]
        %v486 = vld [vmem:[#allocation2 + $0x68] sm:$0xff]
        %v487 = vld [vmem:[#allocation2 + $0x70] sm:$0xff]
        %v488 = vld [vmem:[#allocation2 + $0x78] sm:$0xff]
        %v489 = vld [vmem:[%s377] sm:$0xff]
        %v490 = vld [vmem:[%s377 + $0x8] sm:$0xff]
        %v491 = vld [vmem:[%s377 + $0x10] sm:$0xff]
        %v492 = vld [vmem:[%s377 + $0x18] sm:$0xff]
        %v493 = vld [vmem:[%s377 + $0x20] sm:$0xff]
        %v494 = vld [vmem:[%s377 + $0x28] sm:$0xff]
        %v495 = vld [vmem:[%s377 + $0x30] sm:$0xff]
        %v496 = vld [vmem:[%s377 + $0x38] sm:$0xff]
        %v497 = vld [vmem:[%s377 + $0x40] sm:$0xff]
        %v498 = vld [vmem:[%s377 + $0x48] sm:$0xff]
        %v499 = vld [vmem:[%s377 + $0x50] sm:$0xff]
        %v500 = vld [vmem:[%s377 + $0x58] sm:$0xff]
        %v501 = vld [vmem:[%s377 + $0x60] sm:$0xff]
        %v502 = vld [vmem:[%s377 + $0x68] sm:$0xff]
        %v503 = vld [vmem:[%s377 + $0x70] sm:$0xff]
        %v504 = vld [vmem:[%s377 + $0x78] sm:$0xff]
        %v505 = vld [vmem:[%s377 + $0x80] sm:$0xff]
        %v506 = vld [vmem:[%s377 + $0x88] sm:$0xff]
        %v507 = vld [vmem:[%s377 + $0x90] sm:$0xff]
        %v508 = vld [vmem:[%s377 + $0x98] sm:$0xff]
        %v509 = vld [vmem:[%s377 + $0xa0] sm:$0xff]
        %v510 = vld [vmem:[%s377 + $0xa8] sm:$0xff]
        %v511 = vld [vmem:[%s377 + $0xb0] sm:$0xff]
        %v512 = vld [vmem:[%s377 + $0xb8] sm:$0xff]
        %v513 = vld [vmem:[%s377 + $0xc0] sm:$0xff]
        %v514 = vld [vmem:[%s377 + $0xc8] sm:$0xff]
        %v515 = vld [vmem:[%s377 + $0xd0] sm:$0xff]
        %v516 = vld [vmem:[%s377 + $0xd8] sm:$0xff]
        %v517 = vld [vmem:[%s377 + $0xe0] sm:$0xff]
        %v518 = vld [vmem:[%s377 + $0xe8] sm:$0xff]
        %v519 = vld [vmem:[%s377 + $0xf0] sm:$0xff]
        %v520 = vld [vmem:[%s377 + $0xf8] sm:$0xff]
        %521 = vmatprep.subr.mxu0 0.0
        %522 = vmatpush1.msra.mxu0 %v504
        %523 = vmatprep.subr.mxu0 0.0
        %524 = vmatpush1.msra.mxu0 %v503
        %525 = vmatprep.subr.mxu0 0.0
        %526 = vmatpush1.msra.mxu0 %v502
        %527 = vmatprep.subr.mxu0 0.0
        %528 = vmatpush1.msra.mxu0 %v501
        %529 = vmatprep.subr.mxu0 0.0
        %530 = vmatpush1.msra.mxu0 %v500
        %531 = vmatprep.subr.mxu0 0.0
        %532 = vmatpush1.msra.mxu0 %v499
        %533 = vmatprep.subr.mxu0 0.0
        %534 = vmatpush1.msra.mxu0 %v498
        %535 = vmatprep.subr.mxu0 0.0
        %536 = vmatpush1.msra.mxu0 %v497
        %537 = vmatprep.subr.mxu0 0.0
        %538 = vmatpush1.msra.mxu0 %v496
        %539 = vmatprep.subr.mxu0 0.0
        %540 = vmatpush1.msra.mxu0 %v495
        %541 = vmatprep.subr.mxu0 0.0
        %542 = vmatpush1.msra.mxu0 %v494
        %543 = vmatprep.subr.mxu0 0.0
        %544 = vmatpush1.msra.mxu0 %v493
        %545 = vmatprep.subr.mxu0 0.0
        %546 = vmatpush1.msra.mxu0 %v492
        %547 = vmatprep.subr.mxu0 0.0
        %548 = vmatpush1.msra.mxu0 %v491
        %549 = vmatprep.subr.mxu0 0.0
        %550 = vmatpush1.msra.mxu0 %v490
        %551 = vmatprep.subr.mxu0 0.0
        %552 = vmatpush1.msra.mxu0 %v489
        %553 = vmatprep.subr.mxu0 0.0
        %554 = vmatpush2.msra.mxu0 %v520
        %555 = vmatprep.subr.mxu0 0.0
        %556 = vmatpush2.msra.mxu0 %v519
        %557 = vmatprep.subr.mxu0 0.0
        %558 = vmatpush2.msra.mxu0 %v518
        %559 = vmatprep.subr.mxu0 0.0
        %560 = vmatpush2.msra.mxu0 %v517
        %561 = vmatprep.subr.mxu0 0.0
        %562 = vmatpush2.msra.mxu0 %v516
        %563 = vmatprep.subr.mxu0 0.0
        %564 = vmatpush2.msra.mxu0 %v515
        %565 = vmatprep.subr.mxu0 0.0
        %566 = vmatpush2.msra.mxu0 %v514
        %567 = vmatprep.subr.mxu0 0.0
        %568 = vmatpush2.msra.mxu0 %v513
        %569 = vmatprep.subr.mxu0 0.0
        %570 = vmatpush2.msra.mxu0 %v512
        %571 = vmatprep.subr.mxu0 0.0
        %572 = vmatpush2.msra.mxu0 %v511
        %573 = vmatprep.subr.mxu0 0.0
        %574 = vmatpush2.msra.mxu0 %v510
        %575 = vmatprep.subr.mxu0 0.0
        %576 = vmatpush2.msra.mxu0 %v509
        %577 = vmatprep.subr.mxu0 0.0
        %578 = vmatpush2.msra.mxu0 %v508
        %579 = vmatprep.subr.mxu0 0.0
        %580 = vmatpush2.msra.mxu0 %v507
        %581 = vmatprep.subr.mxu0 0.0
        %582 = vmatpush2.msra.mxu0 %v506
        %583 = vmatprep.subr.mxu0 0.0
        %584 = vmatpush2.msra.mxu0 %v505
        %585 = vmatprep.mubr.f32.mxu0 %v442
        %586 = vmatmul.mubr.f32.gmra.mxu0 %v441
        %v587 = vpop.f32.mrf.mxu0
        %v588 = vadd.f32 0.0, %v587
        %v589 = vpop.f32.mrf.mxu0
        %590 = vmatprep.mubr.f32.mxu0 %v444
        %591 = vmatmul.mubr.f32.gmra.mxu0 %v443
        %v592 = vpop.f32.mrf.mxu0
        %v593 = vadd.f32 0.0, %v592
        %v594 = vpop.f32.mrf.mxu0
        %595 = vmatprep.mubr.f32.mxu0 %v446
        %596 = vmatmul.mubr.f32.gmra.mxu0 %v445
        %v597 = vpop.f32.mrf.mxu0
        %v598 = vadd.f32 0.0, %v597
        %v599 = vpop.f32.mrf.mxu0
        %600 = vmatprep.mubr.f32.mxu0 %v448
        %601 = vmatmul.mubr.f32.gmra.mxu0 %v447
        %v602 = vpop.f32.mrf.mxu0
        %v603 = vadd.f32 0.0, %v602
        %v604 = vpop.f32.mrf.mxu0
        %605 = vmatprep.mubr.f32.mxu0 %v450
        %606 = vmatmul.mubr.f32.gmra.mxu0 %v449
        %v607 = vpop.f32.mrf.mxu0
        %v608 = vadd.f32 0.0, %v607
        %v609 = vpop.f32.mrf.mxu0
        %610 = vmatprep.mubr.f32.mxu0 %v452
        %611 = vmatmul.mubr.f32.gmra.mxu0 %v451
        %v612 = vpop.f32.mrf.mxu0
        %v613 = vadd.f32 0.0, %v612
        %v614 = vpop.f32.mrf.mxu0
        %615 = vmatprep.mubr.f32.mxu0 %v454
        %616 = vmatmul.mubr.f32.gmra.mxu0 %v453
        %v617 = vpop.f32.mrf.mxu0
        %v618 = vadd.f32 0.0, %v617
        %v619 = vpop.f32.mrf.mxu0
        %620 = vmatprep.mubr.f32.mxu0 %v456
        %621 = vmatmul.mubr.f32.gmra.mxu0 %v455
        %v622 = vpop.f32.mrf.mxu0
        %v623 = vadd.f32 0.0, %v622
        %v624 = vpop.f32.mrf.mxu0
        %625 = vmatprep.mubr.f32.mxu0 %v458
        %626 = vmatmul.mubr.f32.gmra.mxu0 %v457
        %v627 = vpop.f32.mrf.mxu0
        %v628 = vadd.f32 0.0, %v627
        %v629 = vpop.f32.mrf.mxu0
        %630 = vmatprep.mubr.f32.mxu0 %v460
        %631 = vmatmul.mubr.f32.gmra.mxu0 %v459
        %v632 = vpop.f32.mrf.mxu0
        %v633 = vadd.f32 0.0, %v632
        %v634 = vpop.f32.mrf.mxu0
        %635 = vmatprep.mubr.f32.mxu0 %v462
        %636 = vmatmul.mubr.f32.gmra.mxu0 %v461
        %v637 = vpop.f32.mrf.mxu0
        %v638 = vadd.f32 0.0, %v637
        %v639 = vpop.f32.mrf.mxu0
        %640 = vmatprep.mubr.f32.mxu0 %v464
        %641 = vmatmul.mubr.f32.gmra.mxu0 %v463
        %v642 = vpop.f32.mrf.mxu0
        %v643 = vadd.f32 0.0, %v642
        %v644 = vpop.f32.mrf.mxu0
        %645 = vmatprep.mubr.f32.mxu0 %v466
        %646 = vmatmul.mubr.f32.gmra.mxu0 %v465
        %v647 = vpop.f32.mrf.mxu0
        %v648 = vadd.f32 0.0, %v647
        %v649 = vpop.f32.mrf.mxu0
        %650 = vmatprep.mubr.f32.mxu0 %v468
        %651 = vmatmul.mubr.f32.gmra.mxu0 %v467
        %v652 = vpop.f32.mrf.mxu0
        %v653 = vadd.f32 0.0, %v652
        %v654 = vpop.f32.mrf.mxu0
        %655 = vmatprep.mubr.f32.mxu0 %v470
        %656 = vmatmul.mubr.f32.gmra.mxu0 %v469
        %v657 = vpop.f32.mrf.mxu0
        %v658 = vadd.f32 0.0, %v657
        %v659 = vpop.f32.mrf.mxu0
        %660 = vmatprep.mubr.f32.mxu0 %v472
        %661 = vmatmul.mubr.f32.gmra.mxu0 %v471
        %v662 = vpop.f32.mrf.mxu0
        %v663 = vadd.f32 0.0, %v662
        %v664 = vpop.f32.mrf.mxu0
        %665 = vdwg.mxu0
        %v666 = vadd.f32 %v473, %v588
        %v667 = vadd.f32 %v474, %v593
        %v668 = vadd.f32 %v475, %v598
        %v669 = vadd.f32 %v476, %v603
        %v670 = vadd.f32 %v477, %v608
        %v671 = vadd.f32 %v478, %v613
        %v672 = vadd.f32 %v479, %v618
        %v673 = vadd.f32 %v480, %v623
        %v674 = vadd.f32 %v481, %v628
        %v675 = vadd.f32 %v482, %v633
        %v676 = vadd.f32 %v483, %v638
        %v677 = vadd.f32 %v484, %v643
        %v678 = vadd.f32 %v485, %v648
        %v679 = vadd.f32 %v486, %v653
        %v680 = vadd.f32 %v487, %v658
        %v681 = vadd.f32 %v488, %v663
        %vm682 = vcmask 261120
        %683 = vst.msk [vmem:[#allocation2] sm:$0xff] %vm682, %v666
        %684 = vst.msk [vmem:[#allocation2 + $0x8] sm:$0xff] %vm682, %v667
        %685 = vst.msk [vmem:[#allocation2 + $0x10] sm:$0xff] %vm682, %v668
        %686 = vst.msk [vmem:[#allocation2 + $0x18] sm:$0xff] %vm682, %v669
        %687 = vst.msk [vmem:[#allocation2 + $0x20] sm:$0xff] %vm682, %v670
        %688 = vst.msk [vmem:[#allocation2 + $0x28] sm:$0xff] %vm682, %v671
        %689 = vst.msk [vmem:[#allocation2 + $0x30] sm:$0xff] %vm682, %v672
        %690 = vst.msk [vmem:[#allocation2 + $0x38] sm:$0xff] %vm682, %v673
        %691 = vst.msk [vmem:[#allocation2 + $0x40] sm:$0xff] %vm682, %v674
        %692 = vst.msk [vmem:[#allocation2 + $0x48] sm:$0xff] %vm682, %v675
        %693 = vst.msk [vmem:[#allocation2 + $0x50] sm:$0xff] %vm682, %v676
        %694 = vst.msk [vmem:[#allocation2 + $0x58] sm:$0xff] %vm682, %v677
        %695 = vst.msk [vmem:[#allocation2 + $0x60] sm:$0xff] %vm682, %v678
        %696 = vst.msk [vmem:[#allocation2 + $0x68] sm:$0xff] %vm682, %v679
        %697 = vst.msk [vmem:[#allocation2 + $0x70] sm:$0xff] %vm682, %v680
        %698 = vst.msk [vmem:[#allocation2 + $0x78] sm:$0xff] %vm682, %v681
        %p699 = scmp.eq.s32.totalorder %s27, 1
        // Predicated region
        $region80: #{tpu_custom_call.1} parent=70 // pred_check
          %p700 = pneg %p699
        $region81: #{tpu_custom_call.1} parent=70 // pred_check_branch
          %702 = sbr.rel (%p700) target = $region83
        $region82: #{tpu_custom_call.1} parent=70 // pred_region
          %v703 = vld [vmem:[#allocation2] sm:$0xff]
          %v704 = vld [vmem:[#allocation2 + $0x8] sm:$0xff]
          %v705 = vld [vmem:[#allocation2 + $0x10] sm:$0xff]
          %v706 = vld [vmem:[#allocation2 + $0x18] sm:$0xff]
          %v707 = vld [vmem:[#allocation2 + $0x20] sm:$0xff]
          %v708 = vld [vmem:[#allocation2 + $0x28] sm:$0xff]
          %v709 = vld [vmem:[#allocation2 + $0x30] sm:$0xff]
          %v710 = vld [vmem:[#allocation2 + $0x38] sm:$0xff]
          %v711 = vld [vmem:[#allocation2 + $0x40] sm:$0xff]
          %v712 = vld [vmem:[#allocation2 + $0x48] sm:$0xff]
          %v713 = vld [vmem:[#allocation2 + $0x50] sm:$0xff]
          %v714 = vld [vmem:[#allocation2 + $0x58] sm:$0xff]
          %v715 = vld [vmem:[#allocation2 + $0x60] sm:$0xff]
          %v716 = vld [vmem:[#allocation2 + $0x68] sm:$0xff]
          %v717 = vld [vmem:[#allocation2 + $0x70] sm:$0xff]
          %v718 = vld [vmem:[#allocation2 + $0x78] sm:$0xff]
          %v719 = vld [vmem:[%s2] sm:$0xff]
          %v720 = vld [vmem:[%s2 + $0x8] sm:$0xff]
          %v721 = vld [vmem:[%s2 + $0x10] sm:$0xff]
          %v722 = vld [vmem:[%s2 + $0x18] sm:$0xff]
          %v723 = vld [vmem:[%s3] sm:$0x1]
          %v725 = vlaneseq
          %v726 = vshrl.u32 %v725, 7
          %v727 = vsub.s32 0, %v726
          %v728 = vrot.slane %v723, %v727
          %v731 = vsel %vm682, %v703, 0
          %v734 = vsel %vm682, %v704, 0
          %v737 = vsel %vm682, %v705, 0
          %v740 = vsel %vm682, %v706, 0
          %v743 = vsel %vm682, %v707, 0
          %v746 = vsel %vm682, %v708, 0
          %v749 = vsel %vm682, %v709, 0
          %v752 = vsel %vm682, %v710, 0
          %v755 = vsel %vm682, %v711, 0
          %v758 = vsel %vm682, %v712, 0
          %v761 = vsel %vm682, %v713, 0
          %v764 = vsel %vm682, %v714, 0
          %v767 = vsel %vm682, %v715, 0
          %v770 = vsel %vm682, %v716, 0
          %v773 = vsel %vm682, %v717, 0
          %v776 = vsel %vm682, %v718, 0
          %778 = vmatprep.subr.mxu0 0.0
          %779 = vmatpush1.msra.mxu0 0.0
          %780 = vmatprep.subr.mxu0 0.0
          %781 = vmatpush1.msra.mxu0 0.0
          %782 = vmatprep.subr.mxu0 0.0
          %783 = vmatpush1.msra.mxu0 0.0
          %784 = vmatprep.subr.mxu0 0.0
          %785 = vmatpush1.msra.mxu0 0.0
          %786 = vmatprep.subr.mxu0 0.0
          %787 = vmatpush1.msra.mxu0 0.0
          %788 = vmatprep.subr.mxu0 0.0
          %789 = vmatpush1.msra.mxu0 0.0
          %790 = vmatprep.subr.mxu0 0.0
          %791 = vmatpush1.msra.mxu0 0.0
          %792 = vmatprep.subr.mxu0 0.0
          %793 = vmatpush1.msra.mxu0 0.0
          %794 = vmatprep.subr.mxu0 0.0
          %795 = vmatpush1.msra.mxu0 0.0
          %796 = vmatprep.subr.mxu0 0.0
          %797 = vmatpush1.msra.mxu0 0.0
          %798 = vmatprep.subr.mxu0 0.0
          %799 = vmatpush1.msra.mxu0 0.0
          %800 = vmatprep.subr.mxu0 0.0
          %801 = vmatpush1.msra.mxu0 0.0
          %802 = vmatprep.subr.mxu0 0.0
          %803 = vmatpush1.msra.mxu0 %v722
          %804 = vmatprep.subr.mxu0 0.0
          %805 = vmatpush1.msra.mxu0 %v721
          %806 = vmatprep.subr.mxu0 0.0
          %807 = vmatpush1.msra.mxu0 %v720
          %808 = vmatprep.subr.mxu0 0.0
          %809 = vmatpush1.msra.mxu0 %v719
          %810 = vmatprep.subr.mxu0 0.0
          %811 = vmatpush2.msra.mxu0 0.0
          %812 = vmatprep.subr.mxu0 0.0
          %813 = vmatpush2.msra.mxu0 0.0
          %814 = vmatprep.subr.mxu0 0.0
          %815 = vmatpush2.msra.mxu0 0.0
          %816 = vmatprep.subr.mxu0 0.0
          %817 = vmatpush2.msra.mxu0 0.0
          %818 = vmatprep.subr.mxu0 0.0
          %819 = vmatpush2.msra.mxu0 0.0
          %820 = vmatprep.subr.mxu0 0.0
          %821 = vmatpush2.msra.mxu0 0.0
          %822 = vmatprep.subr.mxu0 0.0
          %823 = vmatpush2.msra.mxu0 0.0
          %824 = vmatprep.subr.mxu0 0.0
          %825 = vmatpush2.msra.mxu0 0.0
          %826 = vmatprep.subr.mxu0 0.0
          %827 = vmatpush2.msra.mxu0 0.0
          %828 = vmatprep.subr.mxu0 0.0
          %829 = vmatpush2.msra.mxu0 0.0
          %830 = vmatprep.subr.mxu0 0.0
          %831 = vmatpush2.msra.mxu0 0.0
          %832 = vmatprep.subr.mxu0 0.0
          %833 = vmatpush2.msra.mxu0 0.0
          %834 = vmatprep.subr.mxu0 0.0
          %835 = vmatpush2.msra.mxu0 0.0
          %836 = vmatprep.subr.mxu0 0.0
          %837 = vmatpush2.msra.mxu0 0.0
          %838 = vmatprep.subr.mxu0 0.0
          %839 = vmatpush2.msra.mxu0 0.0
          %840 = vmatprep.subr.mxu0 0.0
          %841 = vmatpush2.msra.mxu0 0.0
          %842 = vmatprep.mubr.f32.mxu0 0.0
          %843 = vmatmul.mubr.f32.gmra.mxu0 %v731
          %v844 = vpop.f32.mrf.mxu0
          %v845 = vadd.f32 %v728, %v844
          %v846 = vpop.f32.mrf.mxu0
          %847 = vmatprep.mubr.f32.mxu0 0.0
          %848 = vmatmul.mubr.f32.gmra.mxu0 %v734
          %v849 = vpop.f32.mrf.mxu0
          %v850 = vadd.f32 %v728, %v849
          %v851 = vpop.f32.mrf.mxu0
          %852 = vmatprep.mubr.f32.mxu0 0.0
          %853 = vmatmul.mubr.f32.gmra.mxu0 %v737
          %v854 = vpop.f32.mrf.mxu0
          %v855 = vadd.f32 %v728, %v854
          %v856 = vpop.f32.mrf.mxu0
          %857 = vmatprep.mubr.f32.mxu0 0.0
          %858 = vmatmul.mubr.f32.gmra.mxu0 %v740
          %v859 = vpop.f32.mrf.mxu0
          %v860 = vadd.f32 %v728, %v859
          %v861 = vpop.f32.mrf.mxu0
          %862 = vmatprep.mubr.f32.mxu0 0.0
          %863 = vmatmul.mubr.f32.gmra.mxu0 %v743
          %v864 = vpop.f32.mrf.mxu0
          %v865 = vadd.f32 %v728, %v864
          %v866 = vpop.f32.mrf.mxu0
          %867 = vmatprep.mubr.f32.mxu0 0.0
          %868 = vmatmul.mubr.f32.gmra.mxu0 %v746
          %v869 = vpop.f32.mrf.mxu0
          %v870 = vadd.f32 %v728, %v869
          %v871 = vpop.f32.mrf.mxu0
          %872 = vmatprep.mubr.f32.mxu0 0.0
          %873 = vmatmul.mubr.f32.gmra.mxu0 %v749
          %v874 = vpop.f32.mrf.mxu0
          %v875 = vadd.f32 %v728, %v874
          %v876 = vpop.f32.mrf.mxu0
          %877 = vmatprep.mubr.f32.mxu0 0.0
          %878 = vmatmul.mubr.f32.gmra.mxu0 %v752
          %v879 = vpop.f32.mrf.mxu0
          %v880 = vadd.f32 %v728, %v879
          %v881 = vpop.f32.mrf.mxu0
          %882 = vmatprep.mubr.f32.mxu0 0.0
          %883 = vmatmul.mubr.f32.gmra.mxu0 %v755
          %v884 = vpop.f32.mrf.mxu0
          %v885 = vadd.f32 %v728, %v884
          %v886 = vpop.f32.mrf.mxu0
          %887 = vmatprep.mubr.f32.mxu0 0.0
          %888 = vmatmul.mubr.f32.gmra.mxu0 %v758
          %v889 = vpop.f32.mrf.mxu0
          %v890 = vadd.f32 %v728, %v889
          %v891 = vpop.f32.mrf.mxu0
          %892 = vmatprep.mubr.f32.mxu0 0.0
          %893 = vmatmul.mubr.f32.gmra.mxu0 %v761
          %v894 = vpop.f32.mrf.mxu0
          %v895 = vadd.f32 %v728, %v894
          %v896 = vpop.f32.mrf.mxu0
          %897 = vmatprep.mubr.f32.mxu0 0.0
          %898 = vmatmul.mubr.f32.gmra.mxu0 %v764
          %v899 = vpop.f32.mrf.mxu0
          %v900 = vadd.f32 %v728, %v899
          %v901 = vpop.f32.mrf.mxu0
          %902 = vmatprep.mubr.f32.mxu0 0.0
          %903 = vmatmul.mubr.f32.gmra.mxu0 %v767
          %v904 = vpop.f32.mrf.mxu0
          %v905 = vadd.f32 %v728, %v904
          %v906 = vpop.f32.mrf.mxu0
          %907 = vmatprep.mubr.f32.mxu0 0.0
          %908 = vmatmul.mubr.f32.gmra.mxu0 %v770
          %v909 = vpop.f32.mrf.mxu0
          %v910 = vadd.f32 %v728, %v909
          %v911 = vpop.f32.mrf.mxu0
          %912 = vmatprep.mubr.f32.mxu0 0.0
          %913 = vmatmul.mubr.f32.gmra.mxu0 %v773
          %v914 = vpop.f32.mrf.mxu0
          %v915 = vadd.f32 %v728, %v914
          %v916 = vpop.f32.mrf.mxu0
          %917 = vmatprep.mubr.f32.mxu0 0.0
          %918 = vmatmul.mubr.f32.gmra.mxu0 %v776
          %v919 = vpop.f32.mrf.mxu0
          %v920 = vadd.f32 %v728, %v919
          %v921 = vpop.f32.mrf.mxu0
          %922 = vdwg.mxu0
          %v923 = vmax.f32 %v845, 0.0
          %v924 = vmax.f32 %v850, 0.0
          %v925 = vmax.f32 %v855, 0.0
          %v926 = vmax.f32 %v860, 0.0
          %v927 = vmax.f32 %v865, 0.0
          %v928 = vmax.f32 %v870, 0.0
          %v929 = vmax.f32 %v875, 0.0
          %v930 = vmax.f32 %v880, 0.0
          %v931 = vmax.f32 %v885, 0.0
          %v932 = vmax.f32 %v890, 0.0
          %v933 = vmax.f32 %v895, 0.0
          %v934 = vmax.f32 %v900, 0.0
          %v935 = vmax.f32 %v905, 0.0
          %v936 = vmax.f32 %v910, 0.0
          %v937 = vmax.f32 %v915, 0.0
          %v938 = vmax.f32 %v920, 0.0
          %v939 = vld [vmem:[%s4] sm:$0xff]
          %v940 = vld [vmem:[%s4 + $0x8] sm:$0xff]
          %v941 = vld [vmem:[%s5] sm:$0x1]
          %v943 = vlaneseq
          %v944 = vshrl.u32 %v943, 7
          %v945 = vsub.s32 0, %v944
          %v946 = vrot.slane %v941, %v945
          %vm948 = vcmask 130048
          %v950 = vsel %vm948, %v923, 0
          %v953 = vsel %vm948, %v924, 0
          %v956 = vsel %vm948, %v925, 0
          %v959 = vsel %vm948, %v926, 0
          %v962 = vsel %vm948, %v927, 0
          %v965 = vsel %vm948, %v928, 0
          %v968 = vsel %vm948, %v929, 0
          %v971 = vsel %vm948, %v930, 0
          %v974 = vsel %vm948, %v931, 0
          %v977 = vsel %vm948, %v932, 0
          %v980 = vsel %vm948, %v933, 0
          %v983 = vsel %vm948, %v934, 0
          %v986 = vsel %vm948, %v935, 0
          %v989 = vsel %vm948, %v936, 0
          %v992 = vsel %vm948, %v937, 0
          %v995 = vsel %vm948, %v938, 0
          %997 = vmatprep.subr.mxu0 0.0
          %998 = vmatpush1.msra.mxu0 0.0
          %999 = vmatprep.subr.mxu0 0.0
          %1000 = vmatpush1.msra.mxu0 0.0
          %1001 = vmatprep.subr.mxu0 0.0
          %1002 = vmatpush1.msra.mxu0 0.0
          %1003 = vmatprep.subr.mxu0 0.0
          %1004 = vmatpush1.msra.mxu0 0.0
          %1005 = vmatprep.subr.mxu0 0.0
          %1006 = vmatpush1.msra.mxu0 0.0
          %1007 = vmatprep.subr.mxu0 0.0
          %1008 = vmatpush1.msra.mxu0 0.0
          %1009 = vmatprep.subr.mxu0 0.0
          %1010 = vmatpush1.msra.mxu0 0.0
          %1011 = vmatprep.subr.mxu0 0.0
          %1012 = vmatpush1.msra.mxu0 0.0
          %1013 = vmatprep.subr.mxu0 0.0
          %1014 = vmatpush1.msra.mxu0 0.0
          %1015 = vmatprep.subr.mxu0 0.0
          %1016 = vmatpush1.msra.mxu0 0.0
          %1017 = vmatprep.subr.mxu0 0.0
          %1018 = vmatpush1.msra.mxu0 0.0
          %1019 = vmatprep.subr.mxu0 0.0
          %1020 = vmatpush1.msra.mxu0 0.0
          %1021 = vmatprep.subr.mxu0 0.0
          %1022 = vmatpush1.msra.mxu0 0.0
          %1023 = vmatprep.subr.mxu0 0.0
          %1024 = vmatpush1.msra.mxu0 0.0
          %1025 = vmatprep.subr.mxu0 0.0
          %1026 = vmatpush1.msra.mxu0 %v940
          %1027 = vmatprep.subr.mxu0 0.0
          %1028 = vmatpush1.msra.mxu0 %v939
          %1029 = vmatprep.subr.mxu0 0.0
          %1030 = vmatpush2.msra.mxu0 0.0
          %1031 = vmatprep.subr.mxu0 0.0
          %1032 = vmatpush2.msra.mxu0 0.0
          %1033 = vmatprep.subr.mxu0 0.0
          %1034 = vmatpush2.msra.mxu0 0.0
          %1035 = vmatprep.subr.mxu0 0.0
          %1036 = vmatpush2.msra.mxu0 0.0
          %1037 = vmatprep.subr.mxu0 0.0
          %1038 = vmatpush2.msra.mxu0 0.0
          %1039 = vmatprep.subr.mxu0 0.0
          %1040 = vmatpush2.msra.mxu0 0.0
          %1041 = vmatprep.subr.mxu0 0.0
          %1042 = vmatpush2.msra.mxu0 0.0
          %1043 = vmatprep.subr.mxu0 0.0
          %1044 = vmatpush2.msra.mxu0 0.0
          %1045 = vmatprep.subr.mxu0 0.0
          %1046 = vmatpush2.msra.mxu0 0.0
          %1047 = vmatprep.subr.mxu0 0.0
          %1048 = vmatpush2.msra.mxu0 0.0
          %1049 = vmatprep.subr.mxu0 0.0
          %1050 = vmatpush2.msra.mxu0 0.0
          %1051 = vmatprep.subr.mxu0 0.0
          %1052 = vmatpush2.msra.mxu0 0.0
          %1053 = vmatprep.subr.mxu0 0.0
          %1054 = vmatpush2.msra.mxu0 0.0
          %1055 = vmatprep.subr.mxu0 0.0
          %1056 = vmatpush2.msra.mxu0 0.0
          %1057 = vmatprep.subr.mxu0 0.0
          %1058 = vmatpush2.msra.mxu0 0.0
          %1059 = vmatprep.subr.mxu0 0.0
          %1060 = vmatpush2.msra.mxu0 0.0
          %1061 = vmatprep.mubr.f32.mxu0 0.0
          %1062 = vmatmul.mubr.f32.gmra.mxu0 %v950
          %v1063 = vpop.f32.mrf.mxu0
          %v1064 = vadd.f32 %v946, %v1063
          %v1065 = vpop.f32.mrf.mxu0
          %1066 = vmatprep.mubr.f32.mxu0 0.0
          %1067 = vmatmul.mubr.f32.gmra.mxu0 %v953
          %v1068 = vpop.f32.mrf.mxu0
          %v1069 = vadd.f32 %v946, %v1068
          %v1070 = vpop.f32.mrf.mxu0
          %1071 = vmatprep.mubr.f32.mxu0 0.0
          %1072 = vmatmul.mubr.f32.gmra.mxu0 %v956
          %v1073 = vpop.f32.mrf.mxu0
          %v1074 = vadd.f32 %v946, %v1073
          %v1075 = vpop.f32.mrf.mxu0
          %1076 = vmatprep.mubr.f32.mxu0 0.0
          %1077 = vmatmul.mubr.f32.gmra.mxu0 %v959
          %v1078 = vpop.f32.mrf.mxu0
          %v1079 = vadd.f32 %v946, %v1078
          %v1080 = vpop.f32.mrf.mxu0
          %1081 = vmatprep.mubr.f32.mxu0 0.0
          %1082 = vmatmul.mubr.f32.gmra.mxu0 %v962
          %v1083 = vpop.f32.mrf.mxu0
          %v1084 = vadd.f32 %v946, %v1083
          %v1085 = vpop.f32.mrf.mxu0
          %1086 = vmatprep.mubr.f32.mxu0 0.0
          %1087 = vmatmul.mubr.f32.gmra.mxu0 %v965
          %v1088 = vpop.f32.mrf.mxu0
          %v1089 = vadd.f32 %v946, %v1088
          %v1090 = vpop.f32.mrf.mxu0
          %1091 = vmatprep.mubr.f32.mxu0 0.0
          %1092 = vmatmul.mubr.f32.gmra.mxu0 %v968
          %v1093 = vpop.f32.mrf.mxu0
          %v1094 = vadd.f32 %v946, %v1093
          %v1095 = vpop.f32.mrf.mxu0
          %1096 = vmatprep.mubr.f32.mxu0 0.0
          %1097 = vmatmul.mubr.f32.gmra.mxu0 %v971
          %v1098 = vpop.f32.mrf.mxu0
          %v1099 = vadd.f32 %v946, %v1098
          %v1100 = vpop.f32.mrf.mxu0
          %1101 = vmatprep.mubr.f32.mxu0 0.0
          %1102 = vmatmul.mubr.f32.gmra.mxu0 %v974
          %v1103 = vpop.f32.mrf.mxu0
          %v1104 = vadd.f32 %v946, %v1103
          %v1105 = vpop.f32.mrf.mxu0
          %1106 = vmatprep.mubr.f32.mxu0 0.0
          %1107 = vmatmul.mubr.f32.gmra.mxu0 %v977
          %v1108 = vpop.f32.mrf.mxu0
          %v1109 = vadd.f32 %v946, %v1108
          %v1110 = vpop.f32.mrf.mxu0
          %1111 = vmatprep.mubr.f32.mxu0 0.0
          %1112 = vmatmul.mubr.f32.gmra.mxu0 %v980
          %v1113 = vpop.f32.mrf.mxu0
          %v1114 = vadd.f32 %v946, %v1113
          %v1115 = vpop.f32.mrf.mxu0
          %1116 = vmatprep.mubr.f32.mxu0 0.0
          %1117 = vmatmul.mubr.f32.gmra.mxu0 %v983
          %v1118 = vpop.f32.mrf.mxu0
          %v1119 = vadd.f32 %v946, %v1118
          %v1120 = vpop.f32.mrf.mxu0
          %1121 = vmatprep.mubr.f32.mxu0 0.0
          %1122 = vmatmul.mubr.f32.gmra.mxu0 %v986
          %v1123 = vpop.f32.mrf.mxu0
          %v1124 = vadd.f32 %v946, %v1123
          %v1125 = vpop.f32.mrf.mxu0
          %1126 = vmatprep.mubr.f32.mxu0 0.0
          %1127 = vmatmul.mubr.f32.gmra.mxu0 %v989
          %v1128 = vpop.f32.mrf.mxu0
          %v1129 = vadd.f32 %v946, %v1128
          %v1130 = vpop.f32.mrf.mxu0
          %1131 = vmatprep.mubr.f32.mxu0 0.0
          %1132 = vmatmul.mubr.f32.gmra.mxu0 %v992
          %v1133 = vpop.f32.mrf.mxu0
          %v1134 = vadd.f32 %v946, %v1133
          %v1135 = vpop.f32.mrf.mxu0
          %1136 = vmatprep.mubr.f32.mxu0 0.0
          %1137 = vmatmul.mubr.f32.gmra.mxu0 %v995
          %v1138 = vpop.f32.mrf.mxu0
          %v1139 = vadd.f32 %v946, %v1138
          %v1140 = vpop.f32.mrf.mxu0
          %1141 = vdwg.mxu0
          %v1142 = vmax.f32 %v1064, 0.0
          %v1143 = vmax.f32 %v1069, 0.0
          %v1144 = vmax.f32 %v1074, 0.0
          %v1145 = vmax.f32 %v1079, 0.0
          %v1146 = vmax.f32 %v1084, 0.0
          %v1147 = vmax.f32 %v1089, 0.0
          %v1148 = vmax.f32 %v1094, 0.0
          %v1149 = vmax.f32 %v1099, 0.0
          %v1150 = vmax.f32 %v1104, 0.0
          %v1151 = vmax.f32 %v1109, 0.0
          %v1152 = vmax.f32 %v1114, 0.0
          %v1153 = vmax.f32 %v1119, 0.0
          %v1154 = vmax.f32 %v1124, 0.0
          %v1155 = vmax.f32 %v1129, 0.0
          %v1156 = vmax.f32 %v1134, 0.0
          %v1157 = vmax.f32 %v1139, 0.0
          %v1158 = vld [vmem:[%s6] sm:$0xff]
          %v1159 = vld [vmem:[%s7] sm:$0x1]
          %v1161 = vlaneseq
          %v1162 = vshrl.u32 %v1161, 7
          %v1163 = vsub.s32 0, %v1162
          %v1164 = vrot.slane %v1159, %v1163
          %vm1166 = vcmask 64512
          %v1168 = vsel %vm1166, %v1142, 0
          %v1171 = vsel %vm1166, %v1143, 0
          %v1174 = vsel %vm1166, %v1144, 0
          %v1177 = vsel %vm1166, %v1145, 0
          %v1180 = vsel %vm1166, %v1146, 0
          %v1183 = vsel %vm1166, %v1147, 0
          %v1186 = vsel %vm1166, %v1148, 0
          %v1189 = vsel %vm1166, %v1149, 0
          %v1192 = vsel %vm1166, %v1150, 0
          %v1195 = vsel %vm1166, %v1151, 0
          %v1198 = vsel %vm1166, %v1152, 0
          %v1201 = vsel %vm1166, %v1153, 0
          %v1204 = vsel %vm1166, %v1154, 0
          %v1207 = vsel %vm1166, %v1155, 0
          %v1210 = vsel %vm1166, %v1156, 0
          %v1213 = vsel %vm1166, %v1157, 0
          %1215 = vmatprep.subr.mxu0 0.0
          %1216 = vmatpush1.msra.mxu0 0.0
          %1217 = vmatprep.subr.mxu0 0.0
          %1218 = vmatpush1.msra.mxu0 0.0
          %1219 = vmatprep.subr.mxu0 0.0
          %1220 = vmatpush1.msra.mxu0 0.0
          %1221 = vmatprep.subr.mxu0 0.0
          %1222 = vmatpush1.msra.mxu0 0.0
          %1223 = vmatprep.subr.mxu0 0.0
          %1224 = vmatpush1.msra.mxu0 0.0
          %1225 = vmatprep.subr.mxu0 0.0
          %1226 = vmatpush1.msra.mxu0 0.0
          %1227 = vmatprep.subr.mxu0 0.0
          %1228 = vmatpush1.msra.mxu0 0.0
          %1229 = vmatprep.subr.mxu0 0.0
          %1230 = vmatpush1.msra.mxu0 0.0
          %1231 = vmatprep.subr.mxu0 0.0
          %1232 = vmatpush1.msra.mxu0 0.0
          %1233 = vmatprep.subr.mxu0 0.0
          %1234 = vmatpush1.msra.mxu0 0.0
          %1235 = vmatprep.subr.mxu0 0.0
          %1236 = vmatpush1.msra.mxu0 0.0
          %1237 = vmatprep.subr.mxu0 0.0
          %1238 = vmatpush1.msra.mxu0 0.0
          %1239 = vmatprep.subr.mxu0 0.0
          %1240 = vmatpush1.msra.mxu0 0.0
          %1241 = vmatprep.subr.mxu0 0.0
          %1242 = vmatpush1.msra.mxu0 0.0
          %1243 = vmatprep.subr.mxu0 0.0
          %1244 = vmatpush1.msra.mxu0 0.0
          %1245 = vmatprep.subr.mxu0 0.0
          %1246 = vmatpush1.msra.mxu0 %v1158
          %1247 = vmatprep.subr.mxu0 0.0
          %1248 = vmatpush2.msra.mxu0 0.0
          %1249 = vmatprep.subr.mxu0 0.0
          %1250 = vmatpush2.msra.mxu0 0.0
          %1251 = vmatprep.subr.mxu0 0.0
          %1252 = vmatpush2.msra.mxu0 0.0
          %1253 = vmatprep.subr.mxu0 0.0
          %1254 = vmatpush2.msra.mxu0 0.0
          %1255 = vmatprep.subr.mxu0 0.0
          %1256 = vmatpush2.msra.mxu0 0.0
          %1257 = vmatprep.subr.mxu0 0.0
          %1258 = vmatpush2.msra.mxu0 0.0
          %1259 = vmatprep.subr.mxu0 0.0
          %1260 = vmatpush2.msra.mxu0 0.0
          %1261 = vmatprep.subr.mxu0 0.0
          %1262 = vmatpush2.msra.mxu0 0.0
          %1263 = vmatprep.subr.mxu0 0.0
          %1264 = vmatpush2.msra.mxu0 0.0
          %1265 = vmatprep.subr.mxu0 0.0
          %1266 = vmatpush2.msra.mxu0 0.0
          %1267 = vmatprep.subr.mxu0 0.0
          %1268 = vmatpush2.msra.mxu0 0.0
          %1269 = vmatprep.subr.mxu0 0.0
          %1270 = vmatpush2.msra.mxu0 0.0
          %1271 = vmatprep.subr.mxu0 0.0
          %1272 = vmatpush2.msra.mxu0 0.0
          %1273 = vmatprep.subr.mxu0 0.0
          %1274 = vmatpush2.msra.mxu0 0.0
          %1275 = vmatprep.subr.mxu0 0.0
          %1276 = vmatpush2.msra.mxu0 0.0
          %1277 = vmatprep.subr.mxu0 0.0
          %1278 = vmatpush2.msra.mxu0 0.0
          %1279 = vmatprep.mubr.f32.mxu0 0.0
          %1280 = vmatmul.mubr.f32.gmra.mxu0 %v1168
          %v1281 = vpop.f32.mrf.mxu0
          %v1282 = vadd.f32 %v1164, %v1281
          %v1283 = vpop.f32.mrf.mxu0
          %1284 = vmatprep.mubr.f32.mxu0 0.0
          %1285 = vmatmul.mubr.f32.gmra.mxu0 %v1171
          %v1286 = vpop.f32.mrf.mxu0
          %v1287 = vadd.f32 %v1164, %v1286
          %v1288 = vpop.f32.mrf.mxu0
          %1289 = vmatprep.mubr.f32.mxu0 0.0
          %1290 = vmatmul.mubr.f32.gmra.mxu0 %v1174
          %v1291 = vpop.f32.mrf.mxu0
          %v1292 = vadd.f32 %v1164, %v1291
          %v1293 = vpop.f32.mrf.mxu0
          %1294 = vmatprep.mubr.f32.mxu0 0.0
          %1295 = vmatmul.mubr.f32.gmra.mxu0 %v1177
          %v1296 = vpop.f32.mrf.mxu0
          %v1297 = vadd.f32 %v1164, %v1296
          %v1298 = vpop.f32.mrf.mxu0
          %1299 = vmatprep.mubr.f32.mxu0 0.0
          %1300 = vmatmul.mubr.f32.gmra.mxu0 %v1180
          %v1301 = vpop.f32.mrf.mxu0
          %v1302 = vadd.f32 %v1164, %v1301
          %v1303 = vpop.f32.mrf.mxu0
          %1304 = vmatprep.mubr.f32.mxu0 0.0
          %1305 = vmatmul.mubr.f32.gmra.mxu0 %v1183
          %v1306 = vpop.f32.mrf.mxu0
          %v1307 = vadd.f32 %v1164, %v1306
          %v1308 = vpop.f32.mrf.mxu0
          %1309 = vmatprep.mubr.f32.mxu0 0.0
          %1310 = vmatmul.mubr.f32.gmra.mxu0 %v1186
          %v1311 = vpop.f32.mrf.mxu0
          %v1312 = vadd.f32 %v1164, %v1311
          %v1313 = vpop.f32.mrf.mxu0
          %1314 = vmatprep.mubr.f32.mxu0 0.0
          %1315 = vmatmul.mubr.f32.gmra.mxu0 %v1189
          %v1316 = vpop.f32.mrf.mxu0
          %v1317 = vadd.f32 %v1164, %v1316
          %v1318 = vpop.f32.mrf.mxu0
          %1319 = vmatprep.mubr.f32.mxu0 0.0
          %1320 = vmatmul.mubr.f32.gmra.mxu0 %v1192
          %v1321 = vpop.f32.mrf.mxu0
          %v1322 = vadd.f32 %v1164, %v1321
          %v1323 = vpop.f32.mrf.mxu0
          %1324 = vmatprep.mubr.f32.mxu0 0.0
          %1325 = vmatmul.mubr.f32.gmra.mxu0 %v1195
          %v1326 = vpop.f32.mrf.mxu0
          %v1327 = vadd.f32 %v1164, %v1326
          %v1328 = vpop.f32.mrf.mxu0
          %1329 = vmatprep.mubr.f32.mxu0 0.0
          %1330 = vmatmul.mubr.f32.gmra.mxu0 %v1198
          %v1331 = vpop.f32.mrf.mxu0
          %v1332 = vadd.f32 %v1164, %v1331
          %v1333 = vpop.f32.mrf.mxu0
          %1334 = vmatprep.mubr.f32.mxu0 0.0
          %1335 = vmatmul.mubr.f32.gmra.mxu0 %v1201
          %v1336 = vpop.f32.mrf.mxu0
          %v1337 = vadd.f32 %v1164, %v1336
          %v1338 = vpop.f32.mrf.mxu0
          %1339 = vmatprep.mubr.f32.mxu0 0.0
          %1340 = vmatmul.mubr.f32.gmra.mxu0 %v1204
          %v1341 = vpop.f32.mrf.mxu0
          %v1342 = vadd.f32 %v1164, %v1341
          %v1343 = vpop.f32.mrf.mxu0
          %1344 = vmatprep.mubr.f32.mxu0 0.0
          %1345 = vmatmul.mubr.f32.gmra.mxu0 %v1207
          %v1346 = vpop.f32.mrf.mxu0
          %v1347 = vadd.f32 %v1164, %v1346
          %v1348 = vpop.f32.mrf.mxu0
          %1349 = vmatprep.mubr.f32.mxu0 0.0
          %1350 = vmatmul.mubr.f32.gmra.mxu0 %v1210
          %v1351 = vpop.f32.mrf.mxu0
          %v1352 = vadd.f32 %v1164, %v1351
          %v1353 = vpop.f32.mrf.mxu0
          %1354 = vmatprep.mubr.f32.mxu0 0.0
          %1355 = vmatmul.mubr.f32.gmra.mxu0 %v1213
          %v1356 = vpop.f32.mrf.mxu0
          %v1357 = vadd.f32 %v1164, %v1356
          %v1358 = vpop.f32.mrf.mxu0
          %1359 = vdwg.mxu0
          %1360 = vst [vmem:[%s370] sm:$0xff] %v1282
          %1361 = vst [vmem:[%s370 + $0x8] sm:$0xff] %v1287
          %1362 = vst [vmem:[%s370 + $0x10] sm:$0xff] %v1292
          %1363 = vst [vmem:[%s370 + $0x18] sm:$0xff] %v1297
          %1364 = vst [vmem:[%s370 + $0x20] sm:$0xff] %v1302
          %1365 = vst [vmem:[%s370 + $0x28] sm:$0xff] %v1307
          %1366 = vst [vmem:[%s370 + $0x30] sm:$0xff] %v1312
          %1367 = vst [vmem:[%s370 + $0x38] sm:$0xff] %v1317
          %1368 = vst [vmem:[%s370 + $0x40] sm:$0xff] %v1322
          %1369 = vst [vmem:[%s370 + $0x48] sm:$0xff] %v1327
          %1370 = vst [vmem:[%s370 + $0x50] sm:$0xff] %v1332
          %1371 = vst [vmem:[%s370 + $0x58] sm:$0xff] %v1337
          %1372 = vst [vmem:[%s370 + $0x60] sm:$0xff] %v1342
          %1373 = vst [vmem:[%s370 + $0x68] sm:$0xff] %v1347
          %1374 = vst [vmem:[%s370 + $0x70] sm:$0xff] %v1352
          %1375 = vst [vmem:[%s370 + $0x78] sm:$0xff] %v1357
        $region83: #{tpu_custom_call.1} parent=70 // pred_fallthru
          _
        %s1376 = sand.u32 %s222, 1
        %s1377 = scalar_lea.sflag [#allocation5], %s1376
        %s1378 = sand.u32 %s222, 1
        %s1379 = smul.addr %s1378, 128
        %s1380 = scalar_lea.vmem [#allocation4], %s1379
        // Predicated region
        $region84: #{tpu_custom_call.1} parent=70 // pred_check
          %p1381 = pneg %p232
        $region85: #{tpu_custom_call.1} parent=70 // pred_check_branch
          %1383 = sbr.rel (%p1381) target = $region87
        $region86: #{tpu_custom_call.1} parent=70 // pred_region
          %s1384 = smul.u32 16, %s26
          %s1386 = ssub.s32 2048, 2048
          %1387 = vsyncadd %s1377, %s1386
          %s1388 = smul.addr %s1384, 128
          %s1389 = scalar_lea.hbm %s8, %s1388
          %s1390 = sshll.u32 %s1380, 4
          %s1391 = int_to_ptr.vmem [resolvable:$true] %s1390
          %1396 = dma.vmem_to_hbm [thread:$0]  %s1391, 2048, %s1389, %s1377, 128, 128, 8
        $region87: #{tpu_custom_call.1} parent=70 // pred_fallthru
          _
      $region71: #{tpu_custom_call.1} parent=5 // pred_fallthru
        _
      %p1397 = scmp.le.s32.totalorder 2, %s17
      // Predicated region
      $region88: #{tpu_custom_call.1} parent=5 // pred_check
        %p1398 = pneg %p1397
      $region89: #{tpu_custom_call.1} parent=5 // pred_check_branch
        %1400 = sbr.rel (%p1398) target = $region91
      $region90: #{tpu_custom_call.1} parent=5 // pred_region
        %s1401 = ssub.s32 %s17, 2
        // Predicated region
        $region92: #{tpu_custom_call.1} parent=90 // pred_check
          %p1402 = pneg %p238
        $region93: #{tpu_custom_call.1} parent=90 // pred_check_branch
          %1404 = sbr.rel (%p1402) target = $region95
        $region94: #{tpu_custom_call.1} parent=90 // pred_region
          %s1405 = sand.u32 %s223, 1
          %s1406 = scalar_lea.sflag [#allocation5], %s1405
          %s1407 = sand.u32 %s223, 1
          %s1408 = smul.addr %s1407, 128
          %s1409 = scalar_lea.vmem [#allocation4], %s1408
          %1410 = dma.done %s1406, 2048
        $region95: #{tpu_custom_call.1} parent=90 // pred_fallthru
          _
      $region91: #{tpu_custom_call.1} parent=5 // pred_fallthru
        _
    $region6: #{tpu_custom_call.1} parent=1 // loop_footer
      %s21 = sadd.s32 1, %s17
    $region7: #{tpu_custom_call.1} parent=1 // loop_footer_branch
      %16 = sbr.rel target = $region3
    $region8: #{tpu_custom_call.1} parent=1 // loop_exit
      _
    %1411 = vsyncpa [#allocation5], 1
    %s1412 = scalar_lea.sflag [#allocation5], 1
    %1413 = vsyncpa %s1412, 1

</llo_original>
